<compile_context>
chip_gen: v6e
topology: v6e:2x2x1
jax: 0.10.0
libtpu: 0.0.40
codegen_flags: <defaults>
</compile_context>

<pallas_src>
import numpy as np
import jax
import jax.numpy as jnp
from jax.experimental import pallas as pl
from jax.experimental.pallas import tpu as pltpu

NEG_INF = -1e30
F32 = jnp.float32

ALLOWABLE_ATOMS = ['C', 'F', 'N', 'Cl', 'O', 'I', 'P', 'Br', 'S', 'H', 'Stop']
VALENCY_MAP = {'C': 4, 'F': 1, 'N': 3, 'Cl': 1, 'O': 2, 'I': 1, 'P': 5,
               'Br': 1, 'S': 2, 'H': 1, 'Stop': 1000}
NUM_LABELS = len(ALLOWABLE_ATOMS)            # 11
NUM_BONDS = 4                                # config.num_allowable_bonds
BOND_VALENCY = np.array([1, 2, 3, 1])        # single, double, triple, aromatic

HID = 32                                     # GCN / latent width
IN_DIM = 4 + NUM_LABELS                      # [misc, x, y, z, one-hot(11)] = 15
EMB_DIM = HID + NUM_LABELS                   # 43
PHI_DIM = 1 + HID + HID + NUM_LABELS + HID + NUM_LABELS + 1 + EMB_DIM + EMB_DIM  # 206

# phi column offsets (torch order: time | z_pocket | z_v[u] | lab[u] | z_v | lab | dist | H_t | H_init)
OFF_TIME = 0
OFF_ZP = 1
OFF_ZVU = OFF_ZP + HID                       # 33
OFF_LABU = OFF_ZVU + HID                     # 65
OFF_ZV = OFF_LABU + NUM_LABELS               # 76
OFF_LAB = OFF_ZV + HID                       # 108
OFF_DIST = OFF_LAB + NUM_LABELS              # 119
OFF_HT = OFF_DIST + 1                        # 120
OFF_HI = OFF_HT + EMB_DIM                    # 163


# ---------------------------------------------------------------------------
# Kernel 1: preamble (pocket encoder, ligand VAE encoder, label classifier f)
# ---------------------------------------------------------------------------
def _preamble_kernel(xp_ref, ap_ref, wp1_ref, bp1_ref, wp2_ref, bp2_ref,
                     xl_ref, al_ref, wl1_ref, bl1_ref, wmu_ref, bmu_ref,
                     wlv_ref, blv_ref, eps_ref, wf_ref, bfm_ref, oh_ref,
                     zlig_ref, zpocket_ref, stats_ref):
    # --- pocket GCN encoder + row mean -> z_pocket (1, HID) ---
    ap = ap_ref[...]
    h1 = jnp.dot(ap, jnp.dot(xp_ref[...], wp1_ref[...],
                             preferred_element_type=jnp.float32),
                 preferred_element_type=jnp.float32) + bp1_ref[...]
    h1 = jnp.maximum(h1, 0.0)
    zp = jnp.dot(ap, jnp.dot(h1, wp2_ref[...],
                             preferred_element_type=jnp.float32),
                 preferred_element_type=jnp.float32) + bp2_ref[...]
    zpocket_ref[...] = jnp.mean(zp, axis=0, keepdims=True)

    # --- variational ligand GCN encoder, reparameterisation, KL ---
    al = al_ref[...]
    g1 = jnp.dot(al, jnp.dot(xl_ref[...], wl1_ref[...],
                             preferred_element_type=jnp.float32),
                 preferred_element_type=jnp.float32) + bl1_ref[...]
    g1 = jnp.maximum(g1, 0.0)
    mu = jnp.dot(al, jnp.dot(g1, wmu_ref[...],
                             preferred_element_type=jnp.float32),
                 preferred_element_type=jnp.float32) + bmu_ref[...]
    lv = jnp.dot(al, jnp.dot(g1, wlv_ref[...],
                             preferred_element_type=jnp.float32),
                 preferred_element_type=jnp.float32) + blv_ref[...]
    # stable softplus with a single exp (EUP)
    sp = jnp.maximum(lv, 0.0) + jnp.log1p(jnp.exp(-jnp.abs(lv)))
    sigma = 0.1 + sp
    z = mu + sigma * eps_ref[...]
    zlig_ref[...] = z
    # KL( N(0,1) || N(mu, sigma) ), mean over all elements
    kl = jnp.mean(jnp.log(sigma) + (1.0 + mu * mu) / (2.0 * sigma * sigma) - 0.5,
                  keepdims=True)                                      # (1, 1)

    # --- label classifier f + teacher-forced label log-prob ---
    logits = (jnp.dot(z, wf_ref[...], preferred_element_type=jnp.float32)
              + bfm_ref[...])                                         # mask folded in bias
    mx = jnp.max(logits, axis=-1, keepdims=True)
    e = jnp.exp(logits - mx)
    p = e / jnp.sum(e, axis=-1, keepdims=True)
    picked = jnp.sum(p * oh_ref[...], axis=-1, keepdims=True)         # (n_l, 1)
    lp_lab = jnp.sum(jnp.log(picked), keepdims=True)                  # (1, 1)

    col = jax.lax.broadcasted_iota(jnp.int32, stats_ref.shape, 1)
    stats_ref[...] = (jnp.where(col == 0, kl, 0.0)
                      + jnp.where(col == 1, lp_lab, 0.0))


def _spec(shape):
    nd = len(shape)
    return pl.BlockSpec(shape, lambda i, _nd=nd: (0,) * _nd)


def run_preamble(arrays, n_l):
    out_shapes = (jax.ShapeDtypeStruct((n_l, HID), F32),
                  jax.ShapeDtypeStruct((1, HID), F32),
                  jax.ShapeDtypeStruct((1, 128), F32))
    out_specs = (_spec((n_l, HID)), _spec((1, HID)), _spec((1, 128)))
    return pl.pallas_call(
        _preamble_kernel,
        grid=(1,),
        in_specs=[_spec(a.shape) for a in arrays],
        out_specs=out_specs,
        out_shape=out_shapes,
    )(*arrays)


# ---------------------------------------------------------------------------
# Kernel 2: fused per-BFS-step loop, grid=(num_steps,), scalar-prefetch schedule
# ---------------------------------------------------------------------------
def _loop_step_kernel(u_sm, v_sm, edge_sm,                      # SMEM prefetch
                      a_ref, nbias_ref, bbias_ref, vattr_ref,    # per-step stacks
                      zlig_ref, lab_ref,                         # fixed node feats
                      w1z_ref, w1l_ref, b1_ref, w2_ref, b2_ref,  # g_dec params
                      wgz_ref,                                   # W_g z_v block
                      whzu_ref, whzv_ref, whhtz_ref,             # W_h device blocks
                      out_ref):                                  # (1,128) accumulator
    t = pl.program_id(0)
    u = u_sm[t]
    v = v_sm[t]
    is_edge = edge_sm[t]

    @pl.when(t == 0)
    def _init():
        out_ref[...] = jnp.zeros_like(out_ref)

    a = a_ref[0]                               # (n, n) normalized adjacency at step t
    zlig = zlig_ref[...]                       # (n, HID) fixed decoder node features
    lab = lab_ref[...]                         # (n, NUM_LABELS)

    # g_dec: two dense GCN layers  relu(A (X W1) + b1) -> A (. W2) + b2
    xw = (jnp.dot(zlig, w1z_ref[...], preferred_element_type=jnp.float32)
          + jnp.dot(lab, w1l_ref[...], preferred_element_type=jnp.float32))
    h1 = jnp.maximum(jnp.dot(a, xw, preferred_element_type=jnp.float32)
                     + b1_ref[...], 0.0)
    z_v = jnp.dot(a, jnp.dot(h1, w2_ref[...], preferred_element_type=jnp.float32),
                  preferred_element_type=jnp.float32) + b2_ref[...]    # (n, HID)

    n = z_v.shape[0]
    row_ids = jax.lax.broadcasted_iota(jnp.int32, (n, 1), 0)
    oh_u = (row_ids == u).astype(jnp.float32)
    oh_v = (row_ids == v).astype(jnp.float32)

    # --- edge selector g: softmax over nodes.  Row-constant phi blocks cancel in
    #     the softmax; nbias carries lab@Wg_lab + dist*Wg_dist + node mask. ---
    s = (jnp.dot(z_v, wgz_ref[...], preferred_element_type=jnp.float32)
         + nbias_ref[0])                                               # (n, 1)
    mx = jnp.max(s, axis=0, keepdims=True)
    lse = mx + jnp.log(jnp.sum(jnp.exp(s - mx), axis=0, keepdims=True))
    s_v = jnp.sum(s * oh_v, axis=0, keepdims=True)
    log_p_node = s_v - lse                                             # (1, 1)

    # --- bond classifier h on phi[v]: device-dependent phi blocks only; the rest
    #     (time, z_pocket, lab[u], lab[v], dist[v], H_init, H_t lab-part, bias,
    #      bond mask) is pre-folded into bbias. ---
    z_u_row = jnp.sum(z_v * oh_u, axis=0, keepdims=True)               # z_v[u]  (1, HID)
    z_v_row = jnp.sum(z_v * oh_v, axis=0, keepdims=True)               # z_v[v]  (1, HID)
    z_mean = jnp.mean(z_v, axis=0, keepdims=True)                      # H_t z-part
    bl = (jnp.dot(z_u_row, whzu_ref[...], preferred_element_type=jnp.float32)
          + jnp.dot(z_v_row, whzv_ref[...], preferred_element_type=jnp.float32)
          + jnp.dot(z_mean, whhtz_ref[...], preferred_element_type=jnp.float32)
          + bbias_ref[0])                                              # (1, NUM_BONDS)
    bmx = jnp.max(bl, axis=-1, keepdims=True)
    be = jnp.exp(bl - bmx)
    p_bond = be / jnp.sum(be, axis=-1, keepdims=True)
    log_p_bond = jnp.log(jnp.sum(p_bond * vattr_ref[0], axis=-1, keepdims=True))

    delta = log_p_node + jnp.where(is_edge == 1, log_p_bond, 0.0)
    out_ref[...] = out_ref[...] + delta       # resident lane-dense accumulator


def run_loop_kernel(u_arr, v_arr, e_arr, a_stack, node_bias, bond_bias, vattr,
                    zlig_full, lab_full, w1z, w1l, b1, w2, b2,
                    wg_zv, wh_zvu, wh_zv, wh_htz):
    T, n, _ = a_stack.shape

    def step_map(t, u_sm, v_sm, e_sm):
        return (t, 0, 0)

    def const2(t, u_sm, v_sm, e_sm):
        return (0, 0)

    grid_spec = pltpu.PrefetchScalarGridSpec(
        num_scalar_prefetch=3,
        grid=(T,),
        in_specs=[
            pl.BlockSpec((1, n, n), step_map),
            pl.BlockSpec((1, n, 1), step_map),
            pl.BlockSpec((1, 1, NUM_BONDS), step_map),
            pl.BlockSpec((1, 1, NUM_BONDS), step_map),
            pl.BlockSpec((n, HID), const2),
            pl.BlockSpec((n, NUM_LABELS), const2),
            pl.BlockSpec((HID, HID), const2),
            pl.BlockSpec((NUM_LABELS, HID), const2),
            pl.BlockSpec((1, HID), const2),
            pl.BlockSpec((HID, HID), const2),
            pl.BlockSpec((1, HID), const2),
            pl.BlockSpec((HID, 1), const2),
            pl.BlockSpec((HID, NUM_BONDS), const2),
            pl.BlockSpec((HID, NUM_BONDS), const2),
            pl.BlockSpec((HID, NUM_BONDS), const2),
        ],
        out_specs=pl.BlockSpec((1, 128), const2),
    )
    return pl.pallas_call(
        _loop_step_kernel,
        grid_spec=grid_spec,
        out_shape=jax.ShapeDtypeStruct((1, 128), F32),
        compiler_params=pltpu.CompilerParams(dimension_semantics=("arbitrary",)),
    )(u_arr, v_arr, e_arr, a_stack, node_bias, bond_bias, vattr,
      zlig_full, lab_full, w1z, w1l, b1, w2, b2, wg_zv, wh_zvu, wh_zv, wh_htz)


# ---------------------------------------------------------------------------
# Host-side graph utilities, masks, BFS-schedule simulation (one-time, upfront)
# ---------------------------------------------------------------------------
def normalized_adjacency_np(edge_index, num_nodes):
    a = np.zeros((num_nodes, num_nodes), np.float32)
    if edge_index.size:
        a[edge_index[1], edge_index[0]] = 1.0       # messages src -> dst
    a = a + np.eye(num_nodes, dtype=np.float32)     # self loops (GCNConv default)
    deg = a.sum(axis=1)
    dinv = 1.0 / np.sqrt(np.maximum(deg, 1e-12))
    return dinv[:, None] * a * dinv[None, :]


def bfs_distance(u, adj):
    # TODO(synk): exact unreachable-distance encoding of the original
    # bfs_distance() is unknown; using -1 for unreachable nodes.
    n = adj.shape[0]
    dist = np.full((n,), -1.0, np.float32)
    dist[u] = 0.0
    frontier, d = [u], 0
    while frontier:
        d += 1
        nxt = []
        for a in frontier:
            for b in np.nonzero(adj[a])[0]:
                if dist[b] < 0:
                    dist[b] = d
                    nxt.append(int(b))
        frontier = nxt
    return dist.reshape(n, 1)


def calculate_node_mask_list(valencies, u, closed_mask, adj, unmask=None):
    n = valencies.shape[0]
    if valencies[u] < 1:
        m = np.full((n,), NEG_INF, dtype=np.float32)
    else:
        m = np.zeros((n,), dtype=np.float32)
        m[valencies < 1] = NEG_INF
        m[u] = NEG_INF
        m[closed_mask] = NEG_INF
        m[adj[u]] = NEG_INF
    if unmask is not None:
        m[np.asarray(unmask, dtype=np.int64)] = 0.0
    return m


def calculate_bond_mask_row(valencies, u, v, closed_mask, adj,
                            unmask=None, unmask_bond=None):
    m_list = calculate_node_mask_list(valencies, u, closed_mask, adj, unmask)
    zero_row = np.full((NUM_BONDS,), NEG_INF, np.float32)
    one_row = np.array([0.0, NEG_INF, NEG_INF, 0.0], np.float32)
    two_row = np.array([0.0, 0.0, NEG_INF, 0.0], np.float32)
    e = np.zeros((NUM_BONDS,), np.float32)
    mv = min(valencies[u], valencies[v])
    if mv <= 2:
        e = two_row.copy()
    if mv <= 1:
        e = one_row.copy()
    if mv <= 0:
        e = zero_row.copy()
    if m_list[v] == NEG_INF:
        e = zero_row.copy()
    if unmask_bond is not None:
        for j in unmask_bond:
            e[j - 1] = 0.0
    return e


def build_schedule(bfs_index, bfs_attr, lab_full_np, n, i_stop):
    """Simulate the teacher-forced BFS queue on host; emit stacked per-step data."""
    valencies = np.array(
        [VALENCY_MAP[ALLOWABLE_ATOMS[int(np.argmax(lab_full_np[i]))]] for i in range(n)],
        dtype=np.int64)
    adj = np.zeros((n, n), dtype=bool)
    closed = np.zeros((n,), dtype=bool)
    edge_index = np.array([[bfs_index[0][0]], [bfs_index[0][1]]], dtype=np.int64)
    Q = [int(bfs_index[0][0])]
    time_step = 0
    step = 0
    a_l, dist_l, nmask_l, bmask_l, vattr_l = [], [], [], [], []
    u_l, v_l, edge_l, time_l, distv_l = [], [], [], [], []

    while Q and step < len(bfs_index):
        u = int(Q[0])
        a_l.append(normalized_adjacency_np(edge_index, n))
        dist = bfs_distance(u, adj)
        v = int(bfs_index[step][1])
        v_attr = np.asarray(bfs_attr[step], np.float32)
        step += 1

        nmask = calculate_node_mask_list(valencies, u, closed, adj, unmask=[v, i_stop])
        dist_l.append(dist.astype(np.float32))
        nmask_l.append(nmask.reshape(n, 1))
        u_l.append(u)
        v_l.append(v)
        time_l.append(float(time_step))
        distv_l.append(float(dist[v, 0]))

        if v == i_stop:
            edge_l.append(0)
            bmask_l.append(np.zeros((NUM_BONDS,), np.float32))
            vattr_l.append(np.array([1.0, 0.0, 0.0, 0.0], np.float32))
            popped = Q.pop(0)
            closed[popped] = True
            continue

        edge_l.append(1)
        Q.append(v)
        edge_index = np.concatenate(
            [edge_index, np.array([[u], [v]]), np.array([[v], [u]])], axis=1)
        bond_idx = int(np.argmax(v_attr)) + 1                  # to_bond_index
        bmask_l.append(calculate_bond_mask_row(valencies, u, v, closed, adj,
                                               unmask_bond=[bond_idx]))
        vattr_l.append(v_attr)
        bond_val = int(BOND_VALENCY[int(np.argmax(v_attr))])   # to_bond_valency
        valencies[u] -= bond_val
        valencies[v] -= bond_val
        adj[u, v] = True
        adj[v, u] = True
        time_step += 1

    T = len(u_l)
    if T == 0:
        return None
    return dict(
        a=np.stack(a_l).astype(np.float32),                    # (T, n, n)
        dist=np.stack(dist_l).astype(np.float32),              # (T, n, 1)
        nmask=np.stack(nmask_l).astype(np.float32),            # (T, n, 1)
        bmask=np.stack(bmask_l).astype(np.float32),            # (T, 4)
        vattr=np.stack(vattr_l).astype(np.float32),            # (T, 4)
        u=np.asarray(u_l, np.int32), v=np.asarray(v_l, np.int32),
        is_edge=np.asarray(edge_l, np.int32),
        time=np.asarray(time_l, np.float32),
        dist_v=np.asarray(distv_l, np.float32))


# ---------------------------------------------------------------------------
# Parameters
# ---------------------------------------------------------------------------
def init_params(key):
    keys = iter(jax.random.split(key, 32))

    def lin(din, dout):
        w = 0.1 * jax.random.normal(next(keys), (din, dout), F32)
        b = 0.01 * jax.random.normal(next(keys), (dout,), F32)
        return w, b

    params = {}
    w1, b1 = lin(IN_DIM, HID); w2, b2 = lin(HID, HID)
    params['pocket'] = dict(w1=w1, b1=b1, w2=w2, b2=b2)
    w1, b1 = lin(IN_DIM, HID)
    wmu, bmu = lin(HID, HID)
    wlv, blv = lin(HID, HID)
    params['ligand'] = dict(w1=w1, b1=b1, wmu=wmu, bmu=bmu, wlv=wlv, blv=blv)
    w1, b1 = lin(EMB_DIM, HID); w2, b2 = lin(HID, HID)
    params['g_dec'] = dict(w1=w1, b1=b1, w2=w2, b2=b2)
    wf, bf = lin(HID, NUM_LABELS)
    params['f'] = dict(w=wf, b=bf)
    wg, bg = lin(PHI_DIM, 1)
    params['g'] = dict(w=wg, b=bg)
    wh, bh = lin(PHI_DIM, NUM_BONDS)
    params['h'] = dict(w=wh, b=bh)
    # TODO(synk): sch / mlp_alpha / mlp_theta belong to the coords=True path,
    # which is not implemented here.
    return params


# ---------------------------------------------------------------------------
# TeacherForcer.forward  (generate=False, coords=False, molgym_eval=False)
# ---------------------------------------------------------------------------
def teacher_forcer_forward(params, data_pocket, data_ligand, key):
    x_p = jnp.asarray(data_pocket['x'], F32)
    ei_p = np.asarray(data_pocket['edge_index'])
    x_l = jnp.asarray(data_ligand['x'], F32)
    ei_l = np.asarray(data_ligand['edge_index'])
    bfs_index = list(data_ligand['bfs_index'])
    bfs_attr = [np.asarray(a, np.float32) for a in data_ligand['bfs_attr']]

    n_p, n_l = x_p.shape[0], x_l.shape[0]
    x_l_np = np.asarray(data_ligand['x'], np.float32)
    onehot_np = x_l_np[:, 4:]                                   # (n_l, 11)
    stop_row = np.zeros((1, NUM_LABELS), np.float32)
    stop_row[0, -1] = 1.0
    lab_full_np = np.concatenate([onehot_np, stop_row], axis=0)  # (n, 11)
    n = lab_full_np.shape[0]
    i_stop = n - 1

    # --- preamble kernel: pocket encoder, ligand VAE, label classifier f ---
    a_p = jnp.asarray(normalized_adjacency_np(ei_p, n_p))
    a_l = jnp.asarray(normalized_adjacency_np(ei_l, n_l))
    eps = jax.random.normal(key, (n_l, HID), F32)
    label_mask_row = np.zeros((1, NUM_LABELS), np.float32)
    label_mask_row[0, -1] = NEG_INF
    bf_masked = params['f']['b'].reshape(1, NUM_LABELS) + jnp.asarray(label_mask_row)

    pre_inputs = [
        x_p, a_p,
        params['pocket']['w1'], params['pocket']['b1'].reshape(1, HID),
        params['pocket']['w2'], params['pocket']['b2'].reshape(1, HID),
        x_l, a_l,
        params['ligand']['w1'], params['ligand']['b1'].reshape(1, HID),
        params['ligand']['wmu'], params['ligand']['bmu'].reshape(1, HID),
        params['ligand']['wlv'], params['ligand']['blv'].reshape(1, HID),
        eps, params['f']['w'], bf_masked, jnp.asarray(onehot_np),
    ]
    z_lig, z_pocket, stats = run_preamble(pre_inputs, n_l)
    kl = stats[0, 0]
    log_prob_lab = stats[0, 1]

    # --- host simulation of the teacher-forced BFS schedule (no device deps) ---
    sched = build_schedule(bfs_index, bfs_attr, lab_full_np, n, i_stop)
    if sched is None:
        return log_prob_lab + kl
    T = sched['u'].shape[0]

    # --- fold all step-constant / host-known phi blocks into bias rows ---
    lab_full = jnp.asarray(lab_full_np)
    lab_ns = lab_full[:n_l]

    wg = params['g']['w']                      # (206, 1); bg + row-constant blocks cancel
    wg_zv = wg[OFF_ZV:OFF_ZV + HID]            # (32, 1)
    wg_lab = wg[OFF_LAB:OFF_LAB + NUM_LABELS]  # (11, 1)
    wg_dist = wg[OFF_DIST, 0]                  # scalar

    wh = params['h']['w']                      # (206, 4)
    bh = params['h']['b']                      # (4,)
    wh_time = wh[OFF_TIME:OFF_TIME + 1]
    wh_zp = wh[OFF_ZP:OFF_ZP + HID]
    wh_zvu = wh[OFF_ZVU:OFF_ZVU + HID]
    wh_labu = wh[OFF_LABU:OFF_LABU + NUM_LABELS]
    wh_zv = wh[OFF_ZV:OFF_ZV + HID]
    wh_lab = wh[OFF_LAB:OFF_LAB + NUM_LABELS]
    wh_dist = wh[OFF_DIST:OFF_DIST + 1]
    wh_htz = wh[OFF_HT:OFF_HT + HID]
    wh_htlab = wh[OFF_HT + HID:OFF_HT + EMB_DIM]
    wh_hinit = wh[OFF_HI:OFF_HI + EMB_DIM]

    hinit_row = jnp.concatenate([jnp.mean(z_lig, axis=0, keepdims=True),
                                 jnp.mean(lab_ns, axis=0, keepdims=True)], axis=1)
    lab_full_mean = jnp.mean(lab_full, axis=0, keepdims=True)
    bond_const = (jnp.dot(z_pocket, wh_zp) + jnp.dot(lab_full_mean, wh_htlab)
                  + jnp.dot(hinit_row, wh_hinit) + bh[None, :])        # (1, 4)

    lab_u_oh = jnp.asarray(lab_full_np[sched['u']])                    # (T, 11)
    lab_v_oh = jnp.asarray(lab_full_np[sched['v']])                    # (T, 11)
    bond_bias = (jnp.asarray(sched['time'])[:, None] * wh_time
                 + jnp.dot(lab_u_oh, wh_labu)
                 + jnp.dot(lab_v_oh, wh_lab)
                 + jnp.asarray(sched['dist_v'])[:, None] * wh_dist
                 + jnp.asarray(sched['bmask'])
                 + bond_const).reshape(T, 1, NUM_BONDS)

    node_bias = (jnp.dot(lab_full, wg_lab)[None, :, :]
                 + jnp.asarray(sched['dist']) * wg_dist
                 + jnp.asarray(sched['nmask']))                        # (T, n, 1)

    zlig_full = jnp.concatenate([z_lig, jnp.zeros((1, HID), F32)], axis=0)
    w1 = params['g_dec']['w1']
    w1z, w1l = w1[:HID], w1[HID:]
    b1 = params['g_dec']['b1'].reshape(1, HID)
    w2 = params['g_dec']['w2']
    b2 = params['g_dec']['b2'].reshape(1, HID)

    loop_out = run_loop_kernel(
        jnp.asarray(sched['u']), jnp.asarray(sched['v']), jnp.asarray(sched['is_edge']),
        jnp.asarray(sched['a']), node_bias, bond_bias,
        jnp.asarray(sched['vattr']).reshape(T, 1, NUM_BONDS),
        zlig_full, lab_full, w1z, w1l, b1, w2, b2,
        wg_zv, wh_zvu, wh_zv, wh_htz)

    # TODO(synk): generate-mode (Gumbel sampling), coords=True path (SchNet,
    # CoordinateHelper geometry, mlp_alpha/theta) and molgym_eval are not
    # reproducible as Pallas compute and are omitted.
    return loop_out[0, 0] + log_prob_lab + kl


# ---------------------------------------------------------------------------
if __name__ == "__main__":
    key = jax.random.PRNGKey(0)
    k_params, k_pocket, k_lig, k_eps = jax.random.split(key, 4)
    params = init_params(k_params)

    # pocket: 8 atoms in a ring
    n_pocket = 8
    x_p = 0.5 * jax.random.normal(k_pocket, (n_pocket, IN_DIM), F32)
    ring = np.arange(n_pocket)
    ei_p = np.concatenate([np.stack([ring, (ring + 1) % n_pocket]),
                           np.stack([(ring + 1) % n_pocket, ring])], axis=1)

    # ligand: 6 atoms  C C N O C F
    atom_ids = [0, 0, 2, 4, 0, 1]
    n_lig = len(atom_ids)
    x_l_np = np.array(0.5 * jax.random.normal(k_lig, (n_lig, IN_DIM), F32))
    x_l_np[:, 4:] = 0.0
    for i, a in enumerate(atom_ids):
        x_l_np[i, 4 + a] = 1.0
    x_l = jnp.asarray(x_l_np, F32)

    true_edges = [(0, 1), (0, 2), (1, 3), (1, 4), (2, 5)]
    src = [a for a, b in true_edges] + [b for a, b in true_edges]
    dst = [b for a, b in true_edges] + [a for a, b in true_edges]
    ei_l = np.array([src, dst], dtype=np.int64)

    i_stop = n_lig  # index of the appended Stop node

    def bond(idx):
        v = np.zeros((NUM_BONDS,), np.float32)
        v[idx] = 1.0
        return v

    dummy = bond(0)
    bfs_index = [(0, 1), (0, 2), (0, i_stop), (1, 3), (1, 4), (1, i_stop),
                 (2, 5), (2, i_stop), (3, i_stop), (4, i_stop), (5, i_stop)]
    bfs_attr = [bond(1), bond(0), dummy, bond(0), bond(0), dummy,
                bond(0), dummy, dummy, dummy, dummy]

    data_pocket = {'x': x_p, 'edge_index': ei_p}
    data_ligand = {'x': x_l, 'edge_index': ei_l,
                   'bfs_index': bfs_index, 'bfs_attr': bfs_attr}

    out = teacher_forcer_forward(params, data_pocket, data_ligand, k_eps)
    out = jax.block_until_ready(out)
    assert np.isfinite(float(out)), "non-finite loss"
    print("KERNEL_OK")
</pallas_src>

<mosaic_0001>
module attributes {stable_mosaic.version = 11 : i64} {
  func.func @_preamble_kernel(%arg0: i32, %arg1: memref<8x15xf32, #tpu.memory_space<vmem>>, %arg2: memref<8x8xf32, #tpu.memory_space<vmem>>, %arg3: memref<15x32xf32, #tpu.memory_space<vmem>>, %arg4: memref<1x32xf32, #tpu.memory_space<vmem>>, %arg5: memref<32x32xf32, #tpu.memory_space<vmem>>, %arg6: memref<1x32xf32, #tpu.memory_space<vmem>>, %arg7: memref<6x15xf32, #tpu.memory_space<vmem>>, %arg8: memref<6x6xf32, #tpu.memory_space<vmem>>, %arg9: memref<15x32xf32, #tpu.memory_space<vmem>>, %arg10: memref<1x32xf32, #tpu.memory_space<vmem>>, %arg11: memref<32x32xf32, #tpu.memory_space<vmem>>, %arg12: memref<1x32xf32, #tpu.memory_space<vmem>>, %arg13: memref<32x32xf32, #tpu.memory_space<vmem>>, %arg14: memref<1x32xf32, #tpu.memory_space<vmem>>, %arg15: memref<6x32xf32, #tpu.memory_space<vmem>>, %arg16: memref<32x11xf32, #tpu.memory_space<vmem>>, %arg17: memref<1x11xf32, #tpu.memory_space<vmem>>, %arg18: memref<6x11xf32, #tpu.memory_space<vmem>>, %arg19: memref<6x32xf32, #tpu.memory_space<vmem>>, %arg20: memref<1x32xf32, #tpu.memory_space<vmem>>, %arg21: memref<1x128xf32, #tpu.memory_space<vmem>>) attributes {dimension_semantics = [#tpu.dimension_semantics<arbitrary>], iteration_bounds = array<i64: 1>, scalar_prefetch = 0 : i64, scratch_operands = 0 : i64, tpu.core_type = #tpu.core_type<tc>, window_params = [{pipeline_mode = #tpu.pipeline_mode<synchronous>, transform_indices = @transform_0, window_bounds = array<i64: 8, 15>}, {pipeline_mode = #tpu.pipeline_mode<synchronous>, transform_indices = @transform_1, window_bounds = array<i64: 8, 8>}, {pipeline_mode = #tpu.pipeline_mode<synchronous>, transform_indices = @transform_2, window_bounds = array<i64: 15, 32>}, {pipeline_mode = #tpu.pipeline_mode<synchronous>, transform_indices = @transform_3, window_bounds = array<i64: 1, 32>}, {pipeline_mode = #tpu.pipeline_mode<synchronous>, transform_indices = @transform_4, window_bounds = array<i64: 32, 32>}, {pipeline_mode = #tpu.pipeline_mode<synchronous>, transform_indices = @transform_5, window_bounds = array<i64: 1, 32>}, {pipeline_mode = #tpu.pipeline_mode<synchronous>, transform_indices = @transform_6, window_bounds = array<i64: 6, 15>}, {pipeline_mode = #tpu.pipeline_mode<synchronous>, transform_indices = @transform_7, window_bounds = array<i64: 6, 6>}, {pipeline_mode = #tpu.pipeline_mode<synchronous>, transform_indices = @transform_8, window_bounds = array<i64: 15, 32>}, {pipeline_mode = #tpu.pipeline_mode<synchronous>, transform_indices = @transform_9, window_bounds = array<i64: 1, 32>}, {pipeline_mode = #tpu.pipeline_mode<synchronous>, transform_indices = @transform_10, window_bounds = array<i64: 32, 32>}, {pipeline_mode = #tpu.pipeline_mode<synchronous>, transform_indices = @transform_11, window_bounds = array<i64: 1, 32>}, {pipeline_mode = #tpu.pipeline_mode<synchronous>, transform_indices = @transform_12, window_bounds = array<i64: 32, 32>}, {pipeline_mode = #tpu.pipeline_mode<synchronous>, transform_indices = @transform_13, window_bounds = array<i64: 1, 32>}, {pipeline_mode = #tpu.pipeline_mode<synchronous>, transform_indices = @transform_14, window_bounds = array<i64: 6, 32>}, {pipeline_mode = #tpu.pipeline_mode<synchronous>, transform_indices = @transform_15, window_bounds = array<i64: 32, 11>}, {pipeline_mode = #tpu.pipeline_mode<synchronous>, transform_indices = @transform_16, window_bounds = array<i64: 1, 11>}, {pipeline_mode = #tpu.pipeline_mode<synchronous>, transform_indices = @transform_17, window_bounds = array<i64: 6, 11>}, {pipeline_mode = #tpu.pipeline_mode<synchronous>, transform_indices = @transform_18, window_bounds = array<i64: 6, 32>}, {pipeline_mode = #tpu.pipeline_mode<synchronous>, transform_indices = @transform_19, window_bounds = array<i64: 1, 32>}, {pipeline_mode = #tpu.pipeline_mode<synchronous>, transform_indices = @transform_20, window_bounds = array<i64: 1, 128>}]} {
    %c0 = arith.constant 0 : index
    %c0_0 = arith.constant 0 : index
    %0 = vector.load %arg2[%c0, %c0_0] : memref<8x8xf32, #tpu.memory_space<vmem>>, vector<8x8xf32>
    %c0_1 = arith.constant 0 : index
    %c0_2 = arith.constant 0 : index
    %1 = vector.load %arg1[%c0_1, %c0_2] : memref<8x15xf32, #tpu.memory_space<vmem>>, vector<8x15xf32>
    %c0_3 = arith.constant 0 : index
    %c0_4 = arith.constant 0 : index
    %2 = vector.load %arg3[%c0_3, %c0_4] : memref<15x32xf32, #tpu.memory_space<vmem>>, vector<15x32xf32>
    %cst = arith.constant dense<0.000000e+00> : vector<8x32xf32>
    %3 = tpu.matmul %1, %2, %cst {dimension_numbers = #tpu.dot_dimension_numbers<[1], [0], [0], [1], [0, 0, 1, 1], [], []>} : vector<8x15xf32>, vector<15x32xf32>, vector<8x32xf32> -> vector<8x32xf32>
    %cst_5 = arith.constant dense<0.000000e+00> : vector<8x32xf32>
    %4 = tpu.matmul %0, %3, %cst_5 {dimension_numbers = #tpu.dot_dimension_numbers<[1], [0], [0], [1], [0, 0, 1, 1], [], []>} : vector<8x8xf32>, vector<8x32xf32>, vector<8x32xf32> -> vector<8x32xf32>
    %c0_6 = arith.constant 0 : index
    %c0_7 = arith.constant 0 : index
    %5 = vector.load %arg4[%c0_6, %c0_7] : memref<1x32xf32, #tpu.memory_space<vmem>>, vector<1x32xf32>
    %6 = vector.broadcast %5 : vector<1x32xf32> to vector<8x32xf32>
    %7 = arith.addf %4, %6 : vector<8x32xf32>
    %cst_8 = arith.constant 0.000000e+00 : f32
    %8 = vector.broadcast %cst_8 : f32 to vector<8x32xf32>
    %9 = arith.maximumf %7, %8 : vector<8x32xf32>
    %c0_9 = arith.constant 0 : index
    %c0_10 = arith.constant 0 : index
    %10 = vector.load %arg5[%c0_9, %c0_10] : memref<32x32xf32, #tpu.memory_space<vmem>>, vector<32x32xf32>
    %cst_11 = arith.constant dense<0.000000e+00> : vector<8x32xf32>
    %11 = tpu.matmul %9, %10, %cst_11 {dimension_numbers = #tpu.dot_dimension_numbers<[1], [0], [0], [1], [0, 0, 1, 1], [], []>} : vector<8x32xf32>, vector<32x32xf32>, vector<8x32xf32> -> vector<8x32xf32>
    %cst_12 = arith.constant dense<0.000000e+00> : vector<8x32xf32>
    %12 = tpu.matmul %0, %11, %cst_12 {dimension_numbers = #tpu.dot_dimension_numbers<[1], [0], [0], [1], [0, 0, 1, 1], [], []>} : vector<8x8xf32>, vector<8x32xf32>, vector<8x32xf32> -> vector<8x32xf32>
    %c0_13 = arith.constant 0 : index
    %c0_14 = arith.constant 0 : index
    %13 = vector.load %arg6[%c0_13, %c0_14] : memref<1x32xf32, #tpu.memory_space<vmem>>, vector<1x32xf32>
    %14 = vector.broadcast %13 : vector<1x32xf32> to vector<8x32xf32>
    %15 = arith.addf %12, %14 : vector<8x32xf32>
    %cst_15 = arith.constant dense<0.000000e+00> : vector<32xf32>
    %16 = vector.multi_reduction <add>, %15, %cst_15 [0] : vector<8x32xf32> to vector<32xf32>
    %17 = vector.shape_cast %16 : vector<32xf32> to vector<1x32xf32>
    %cst_16 = arith.constant 8.000000e+00 : f32
    %18 = vector.broadcast %cst_16 : f32 to vector<1x32xf32>
    %19 = arith.divf %17, %18 : vector<1x32xf32>
    %c0_17 = arith.constant 0 : index
    %c0_18 = arith.constant 0 : index
    %20 = vector.load %arg20[%c0_17, %c0_18] : memref<1x32xf32, #tpu.memory_space<vmem>>, vector<1x32xf32>
    tpu.vector_store %arg20[%c0_17, %c0_18], %19 {strides = array<i32>} : memref<1x32xf32, #tpu.memory_space<vmem>>, vector<1x32xf32>,
    %c0_19 = arith.constant 0 : index
    %c0_20 = arith.constant 0 : index
    %21 = vector.load %arg8[%c0_19, %c0_20] : memref<6x6xf32, #tpu.memory_space<vmem>>, vector<6x6xf32>
    %c0_21 = arith.constant 0 : index
    %c0_22 = arith.constant 0 : index
    %22 = vector.load %arg7[%c0_21, %c0_22] : memref<6x15xf32, #tpu.memory_space<vmem>>, vector<6x15xf32>
    %c0_23 = arith.constant 0 : index
    %c0_24 = arith.constant 0 : index
    %23 = vector.load %arg9[%c0_23, %c0_24] : memref<15x32xf32, #tpu.memory_space<vmem>>, vector<15x32xf32>
    %cst_25 = arith.constant dense<0.000000e+00> : vector<6x32xf32>
    %24 = tpu.matmul %22, %23, %cst_25 {dimension_numbers = #tpu.dot_dimension_numbers<[1], [0], [0], [1], [0, 0, 1, 1], [], []>} : vector<6x15xf32>, vector<15x32xf32>, vector<6x32xf32> -> vector<6x32xf32>
    %cst_26 = arith.constant dense<0.000000e+00> : vector<6x32xf32>
    %25 = tpu.matmul %21, %24, %cst_26 {dimension_numbers = #tpu.dot_dimension_numbers<[1], [0], [0], [1], [0, 0, 1, 1], [], []>} : vector<6x6xf32>, vector<6x32xf32>, vector<6x32xf32> -> vector<6x32xf32>
    %c0_27 = arith.constant 0 : index
    %c0_28 = arith.constant 0 : index
    %26 = vector.load %arg10[%c0_27, %c0_28] : memref<1x32xf32, #tpu.memory_space<vmem>>, vector<1x32xf32>
    %27 = vector.broadcast %26 : vector<1x32xf32> to vector<6x32xf32>
    %28 = arith.addf %25, %27 : vector<6x32xf32>
    %cst_29 = arith.constant 0.000000e+00 : f32
    %29 = vector.broadcast %cst_29 : f32 to vector<6x32xf32>
    %30 = arith.maximumf %28, %29 : vector<6x32xf32>
    %c0_30 = arith.constant 0 : index
    %c0_31 = arith.constant 0 : index
    %31 = vector.load %arg11[%c0_30, %c0_31] : memref<32x32xf32, #tpu.memory_space<vmem>>, vector<32x32xf32>
    %cst_32 = arith.constant dense<0.000000e+00> : vector<6x32xf32>
    %32 = tpu.matmul %30, %31, %cst_32 {dimension_numbers = #tpu.dot_dimension_numbers<[1], [0], [0], [1], [0, 0, 1, 1], [], []>} : vector<6x32xf32>, vector<32x32xf32>, vector<6x32xf32> -> vector<6x32xf32>
    %cst_33 = arith.constant dense<0.000000e+00> : vector<6x32xf32>
    %33 = tpu.matmul %21, %32, %cst_33 {dimension_numbers = #tpu.dot_dimension_numbers<[1], [0], [0], [1], [0, 0, 1, 1], [], []>} : vector<6x6xf32>, vector<6x32xf32>, vector<6x32xf32> -> vector<6x32xf32>
    %c0_34 = arith.constant 0 : index
    %c0_35 = arith.constant 0 : index
    %34 = vector.load %arg12[%c0_34, %c0_35] : memref<1x32xf32, #tpu.memory_space<vmem>>, vector<1x32xf32>
    %35 = vector.broadcast %34 : vector<1x32xf32> to vector<6x32xf32>
    %36 = arith.addf %33, %35 : vector<6x32xf32>
    %c0_36 = arith.constant 0 : index
    %c0_37 = arith.constant 0 : index
    %37 = vector.load %arg13[%c0_36, %c0_37] : memref<32x32xf32, #tpu.memory_space<vmem>>, vector<32x32xf32>
    %cst_38 = arith.constant dense<0.000000e+00> : vector<6x32xf32>
    %38 = tpu.matmul %30, %37, %cst_38 {dimension_numbers = #tpu.dot_dimension_numbers<[1], [0], [0], [1], [0, 0, 1, 1], [], []>} : vector<6x32xf32>, vector<32x32xf32>, vector<6x32xf32> -> vector<6x32xf32>
    %cst_39 = arith.constant dense<0.000000e+00> : vector<6x32xf32>
    %39 = tpu.matmul %21, %38, %cst_39 {dimension_numbers = #tpu.dot_dimension_numbers<[1], [0], [0], [1], [0, 0, 1, 1], [], []>} : vector<6x6xf32>, vector<6x32xf32>, vector<6x32xf32> -> vector<6x32xf32>
    %c0_40 = arith.constant 0 : index
    %c0_41 = arith.constant 0 : index
    %40 = vector.load %arg14[%c0_40, %c0_41] : memref<1x32xf32, #tpu.memory_space<vmem>>, vector<1x32xf32>
    %41 = vector.broadcast %40 : vector<1x32xf32> to vector<6x32xf32>
    %42 = arith.addf %39, %41 : vector<6x32xf32>
    %cst_42 = arith.constant 0.000000e+00 : f32
    %43 = vector.broadcast %cst_42 : f32 to vector<6x32xf32>
    %44 = arith.maximumf %42, %43 : vector<6x32xf32>
    %45 = math.absf %42 : vector<6x32xf32>
    %cst_43 = arith.constant 0.000000e+00 : f32
    %46 = vector.broadcast %cst_43 : f32 to vector<6x32xf32>
    %47 = arith.subf %46, %45 : vector<6x32xf32>
    %48 = math.exp %47 : vector<6x32xf32>
    %49 = math.log1p %48 : vector<6x32xf32>
    %50 = arith.addf %44, %49 : vector<6x32xf32>
    %cst_44 = arith.constant 1.000000e-01 : f32
    %51 = vector.broadcast %cst_44 : f32 to vector<6x32xf32>
    %52 = arith.addf %51, %50 : vector<6x32xf32>
    %c0_45 = arith.constant 0 : index
    %c0_46 = arith.constant 0 : index
    %53 = vector.load %arg15[%c0_45, %c0_46] : memref<6x32xf32, #tpu.memory_space<vmem>>, vector<6x32xf32>
    %54 = arith.mulf %52, %53 : vector<6x32xf32>
    %55 = arith.addf %36, %54 : vector<6x32xf32>
    %c0_47 = arith.constant 0 : index
    %c0_48 = arith.constant 0 : index
    %56 = vector.load %arg19[%c0_47, %c0_48] : memref<6x32xf32, #tpu.memory_space<vmem>>, vector<6x32xf32>
    tpu.vector_store %arg19[%c0_47, %c0_48], %55 {strides = array<i32>} : memref<6x32xf32, #tpu.memory_space<vmem>>, vector<6x32xf32>,
    %57 = math.log %52 : vector<6x32xf32>
    %58 = arith.mulf %36, %36 : vector<6x32xf32>
    %cst_49 = arith.constant 1.000000e+00 : f32
    %59 = vector.broadcast %cst_49 : f32 to vector<6x32xf32>
    %60 = arith.addf %59, %58 : vector<6x32xf32>
    %cst_50 = arith.constant 2.000000e+00 : f32
    %61 = vector.broadcast %cst_50 : f32 to vector<6x32xf32>
    %62 = arith.mulf %61, %52 : vector<6x32xf32>
    %63 = arith.mulf %62, %52 : vector<6x32xf32>
    %64 = arith.divf %60, %63 : vector<6x32xf32>
    %65 = arith.addf %57, %64 : vector<6x32xf32>
    %cst_51 = arith.constant 5.000000e-01 : f32
    %66 = vector.broadcast %cst_51 : f32 to vector<6x32xf32>
    %67 = arith.subf %65, %66 : vector<6x32xf32>
    %68 = vector.shape_cast %67 : vector<6x32xf32> to vector<1x6x32xf32>
    %cst_52 = arith.constant dense<0.000000e+00> : vector<1xf32>
    %69 = vector.multi_reduction <add>, %68, %cst_52 [1, 2] : vector<1x6x32xf32> to vector<1xf32>
    %70 = vector.shape_cast %69 : vector<1xf32> to vector<1x1x1xf32>
    %71 = vector.extract %70[0, 0, 0] : f32 from vector<1x1x1xf32>
    %72 = vector.broadcast %71 : f32 to vector<1x1xf32>
    %cst_53 = arith.constant 1.920000e+02 : f32
    %73 = vector.broadcast %cst_53 : f32 to vector<1x1xf32>
    %74 = arith.divf %72, %73 : vector<1x1xf32>
    %c0_54 = arith.constant 0 : index
    %c0_55 = arith.constant 0 : index
    %75 = vector.load %arg16[%c0_54, %c0_55] : memref<32x11xf32, #tpu.memory_space<vmem>>, vector<32x11xf32>
    %cst_56 = arith.constant dense<0.000000e+00> : vector<6x11xf32>
    %76 = tpu.matmul %55, %75, %cst_56 {dimension_numbers = #tpu.dot_dimension_numbers<[1], [0], [0], [1], [0, 0, 1, 1], [], []>} : vector<6x32xf32>, vector<32x11xf32>, vector<6x11xf32> -> vector<6x11xf32>
    %c0_57 = arith.constant 0 : index
    %c0_58 = arith.constant 0 : index
    %77 = vector.load %arg17[%c0_57, %c0_58] : memref<1x11xf32, #tpu.memory_space<vmem>>, vector<1x11xf32>
    %78 = vector.broadcast %77 : vector<1x11xf32> to vector<6x11xf32>
    %79 = arith.addf %76, %78 : vector<6x11xf32>
    %cst_59 = arith.constant dense<0xFF800000> : vector<6xf32>
    %80 = vector.multi_reduction <maximumf>, %79, %cst_59 [1] : vector<6x11xf32> to vector<6xf32>
    %81 = vector.shape_cast %80 : vector<6xf32> to vector<6x1xf32>
    %82 = vector.broadcast %81 : vector<6x1xf32> to vector<6x11xf32>
    %83 = arith.subf %79, %82 : vector<6x11xf32>
    %84 = math.exp %83 : vector<6x11xf32>
    %cst_60 = arith.constant dense<0.000000e+00> : vector<6xf32>
    %85 = vector.multi_reduction <add>, %84, %cst_60 [1] : vector<6x11xf32> to vector<6xf32>
    %86 = vector.shape_cast %85 : vector<6xf32> to vector<6x1xf32>
    %87 = vector.broadcast %86 : vector<6x1xf32> to vector<6x11xf32>
    %88 = arith.divf %84, %87 : vector<6x11xf32>
    %c0_61 = arith.constant 0 : index
    %c0_62 = arith.constant 0 : index
    %89 = vector.load %arg18[%c0_61, %c0_62] : memref<6x11xf32, #tpu.memory_space<vmem>>, vector<6x11xf32>
    %90 = arith.mulf %88, %89 : vector<6x11xf32>
    %cst_63 = arith.constant dense<0.000000e+00> : vector<6xf32>
    %91 = vector.multi_reduction <add>, %90, %cst_63 [1] : vector<6x11xf32> to vector<6xf32>
    %92 = vector.shape_cast %91 : vector<6xf32> to vector<6x1xf32>
    %93 = math.log %92 : vector<6x1xf32>
    %94 = vector.shape_cast %93 : vector<6x1xf32> to vector<1x6x1xf32>
    %cst_64 = arith.constant dense<0.000000e+00> : vector<1xf32>
    %95 = vector.multi_reduction <add>, %94, %cst_64 [1, 2] : vector<1x6x1xf32> to vector<1xf32>
    %96 = vector.shape_cast %95 : vector<1xf32> to vector<1x1x1xf32>
    %97 = vector.extract %96[0, 0, 0] : f32 from vector<1x1x1xf32>
    %98 = vector.broadcast %97 : f32 to vector<1x1xf32>
    %99 = tpu.iota {dimensions = array<i32: 1>} : vector<1x128xi32>
    %c0_i32 = arith.constant 0 : i32
    %100 = vector.broadcast %c0_i32 : i32 to vector<1x128xi32>
    %101 = arith.cmpi eq, %99, %100 : vector<1x128xi32>
    %cst_65 = arith.constant 0.000000e+00 : f32
    %102 = vector.shape_cast %74 : vector<1x1xf32> to vector<1x1xf32>
    %103 = vector.broadcast %102 : vector<1x1xf32> to vector<1x128xf32>
    %104 = vector.broadcast %cst_65 : f32 to vector<1x128xf32>
    %105 = arith.select %101, %103, %104 : vector<1x128xi1>, vector<1x128xf32>
    %c1_i32 = arith.constant 1 : i32
    %106 = vector.broadcast %c1_i32 : i32 to vector<1x128xi32>
    %107 = arith.cmpi eq, %99, %106 : vector<1x128xi32>
    %cst_66 = arith.constant 0.000000e+00 : f32
    %108 = vector.shape_cast %98 : vector<1x1xf32> to vector<1x1xf32>
    %109 = vector.broadcast %108 : vector<1x1xf32> to vector<1x128xf32>
    %110 = vector.broadcast %cst_66 : f32 to vector<1x128xf32>
    %111 = arith.select %107, %109, %110 : vector<1x128xi1>, vector<1x128xf32>
    %112 = arith.addf %105, %111 : vector<1x128xf32>
    %c0_67 = arith.constant 0 : index
    %c0_68 = arith.constant 0 : index
    %113 = vector.load %arg21[%c0_67, %c0_68] : memref<1x128xf32, #tpu.memory_space<vmem>>, vector<1x128xf32>
    tpu.vector_store %arg21[%c0_67, %c0_68], %112 {strides = array<i32>} : memref<1x128xf32, #tpu.memory_space<vmem>>, vector<1x128xf32>,
    return
  }
  func.func @transform_0(%arg0: i32) -> (i32, i32) {
    %c0_i32 = arith.constant 0 : i32
    %c0_i32_0 = arith.constant 0 : i32
    %c0_i32_1 = arith.constant 0 : i32
    return %c0_i32, %c0_i32_0 : i32, i32
  }
  func.func @transform_1(%arg0: i32) -> (i32, i32) {
    %c0_i32 = arith.constant 0 : i32
    %c0_i32_0 = arith.constant 0 : i32
    %c0_i32_1 = arith.constant 0 : i32
    return %c0_i32, %c0_i32_0 : i32, i32
  }
  func.func @transform_2(%arg0: i32) -> (i32, i32) {
    %c0_i32 = arith.constant 0 : i32
    %c0_i32_0 = arith.constant 0 : i32
    %c0_i32_1 = arith.constant 0 : i32
    return %c0_i32, %c0_i32_0 : i32, i32
  }
  func.func @transform_3(%arg0: i32) -> (i32, i32) {
    %c0_i32 = arith.constant 0 : i32
    %c0_i32_0 = arith.constant 0 : i32
    %c0_i32_1 = arith.constant 0 : i32
    return %c0_i32, %c0_i32_0 : i32, i32
  }
  func.func @transform_4(%arg0: i32) -> (i32, i32) {
    %c0_i32 = arith.constant 0 : i32
    %c0_i32_0 = arith.constant 0 : i32
    %c0_i32_1 = arith.constant 0 : i32
    return %c0_i32, %c0_i32_0 : i32, i32
  }
  func.func @transform_5(%arg0: i32) -> (i32, i32) {
    %c0_i32 = arith.constant 0 : i32
    %c0_i32_0 = arith.constant 0 : i32
    %c0_i32_1 = arith.constant 0 : i32
    return %c0_i32, %c0_i32_0 : i32, i32
  }
  func.func @transform_6(%arg0: i32) -> (i32, i32) {
    %c0_i32 = arith.constant 0 : i32
    %c0_i32_0 = arith.constant 0 : i32
    %c0_i32_1 = arith.constant 0 : i32
    return %c0_i32, %c0_i32_0 : i32, i32
  }
  func.func @transform_7(%arg0: i32) -> (i32, i32) {
    %c0_i32 = arith.constant 0 : i32
    %c0_i32_0 = arith.constant 0 : i32
    %c0_i32_1 = arith.constant 0 : i32
    return %c0_i32, %c0_i32_0 : i32, i32
  }
  func.func @transform_8(%arg0: i32) -> (i32, i32) {
    %c0_i32 = arith.constant 0 : i32
    %c0_i32_0 = arith.constant 0 : i32
    %c0_i32_1 = arith.constant 0 : i32
    return %c0_i32, %c0_i32_0 : i32, i32
  }
  func.func @transform_9(%arg0: i32) -> (i32, i32) {
    %c0_i32 = arith.constant 0 : i32
    %c0_i32_0 = arith.constant 0 : i32
    %c0_i32_1 = arith.constant 0 : i32
    return %c0_i32, %c0_i32_0 : i32, i32
  }
  func.func @transform_10(%arg0: i32) -> (i32, i32) {
    %c0_i32 = arith.constant 0 : i32
    %c0_i32_0 = arith.constant 0 : i32
    %c0_i32_1 = arith.constant 0 : i32
    return %c0_i32, %c0_i32_0 : i32, i32
  }
  func.func @transform_11(%arg0: i32) -> (i32, i32) {
    %c0_i32 = arith.constant 0 : i32
    %c0_i32_0 = arith.constant 0 : i32
    %c0_i32_1 = arith.constant 0 : i32
    return %c0_i32, %c0_i32_0 : i32, i32
  }
  func.func @transform_12(%arg0: i32) -> (i32, i32) {
    %c0_i32 = arith.constant 0 : i32
    %c0_i32_0 = arith.constant 0 : i32
    %c0_i32_1 = arith.constant 0 : i32
    return %c0_i32, %c0_i32_0 : i32, i32
  }
  func.func @transform_13(%arg0: i32) -> (i32, i32) {
    %c0_i32 = arith.constant 0 : i32
    %c0_i32_0 = arith.constant 0 : i32
    %c0_i32_1 = arith.constant 0 : i32
    return %c0_i32, %c0_i32_0 : i32, i32
  }
  func.func @transform_14(%arg0: i32) -> (i32, i32) {
    %c0_i32 = arith.constant 0 : i32
    %c0_i32_0 = arith.constant 0 : i32
    %c0_i32_1 = arith.constant 0 : i32
    return %c0_i32, %c0_i32_0 : i32, i32
  }
  func.func @transform_15(%arg0: i32) -> (i32, i32) {
    %c0_i32 = arith.constant 0 : i32
    %c0_i32_0 = arith.constant 0 : i32
    %c0_i32_1 = arith.constant 0 : i32
    return %c0_i32, %c0_i32_0 : i32, i32
  }
  func.func @transform_16(%arg0: i32) -> (i32, i32) {
    %c0_i32 = arith.constant 0 : i32
    %c0_i32_0 = arith.constant 0 : i32
    %c0_i32_1 = arith.constant 0 : i32
    return %c0_i32, %c0_i32_0 : i32, i32
  }
  func.func @transform_17(%arg0: i32) -> (i32, i32) {
    %c0_i32 = arith.constant 0 : i32
    %c0_i32_0 = arith.constant 0 : i32
    %c0_i32_1 = arith.constant 0 : i32
    return %c0_i32, %c0_i32_0 : i32, i32
  }
  func.func @transform_18(%arg0: i32) -> (i32, i32) {
    %c0_i32 = arith.constant 0 : i32
    %c0_i32_0 = arith.constant 0 : i32
    %c0_i32_1 = arith.constant 0 : i32
    return %c0_i32, %c0_i32_0 : i32, i32
  }
  func.func @transform_19(%arg0: i32) -> (i32, i32) {
    %c0_i32 = arith.constant 0 : i32
    %c0_i32_0 = arith.constant 0 : i32
    %c0_i32_1 = arith.constant 0 : i32
    return %c0_i32, %c0_i32_0 : i32, i32
  }
  func.func @transform_20(%arg0: i32) -> (i32, i32) {
    %c0_i32 = arith.constant 0 : i32
    %c0_i32_0 = arith.constant 0 : i32
    %c0_i32_1 = arith.constant 0 : i32
    return %c0_i32, %c0_i32_0 : i32, i32
  }
}

</mosaic_0001>

<llo_original>
// kernel: tpu_custom_call.1
$region0: #{tpu_custom_call.1}
  #allocation0 [shape = 'u32[]', space=smem, size = 0x4, offset = 0x4, fixed_abs, tag = 'smem constant byte address 0x4 - core index']
  #allocation1 [shape = 'u32[144,128]{1,0:T(1,128)}', space=vmem, size = 0x12000, scoped, tag = 'internal scratch']
  %s0 = inlined_call_operand.hbm [shape: f32[8,15], index: 0, kind: input, shape index: {}]
  %s1 = inlined_call_operand.hbm [shape: f32[8,8], index: 1, kind: input, shape index: {}]
  %s2 = inlined_call_operand.hbm [shape: f32[15,32], index: 2, kind: input, shape index: {}]
  %s3 = inlined_call_operand.hbm [shape: f32[1,32], index: 3, kind: input, shape index: {}]
  %s4 = inlined_call_operand.vmem [shape: f32[32,32], index: 4, kind: input, shape index: {}]
  %s5 = inlined_call_operand.hbm [shape: f32[1,32], index: 5, kind: input, shape index: {}]
  %s6 = inlined_call_operand.hbm [shape: f32[6,15], index: 6, kind: input, shape index: {}]
  %s7 = inlined_call_operand.hbm [shape: f32[6,6], index: 7, kind: input, shape index: {}]
  %s8 = inlined_call_operand.hbm [shape: f32[15,32], index: 8, kind: input, shape index: {}]
  %s9 = inlined_call_operand.hbm [shape: f32[1,32], index: 9, kind: input, shape index: {}]
  %s10 = inlined_call_operand.vmem [shape: f32[32,32], index: 10, kind: input, shape index: {}]
  %s11 = inlined_call_operand.vmem [shape: f32[1,32], index: 11, kind: input, shape index: {}]
  %s12 = inlined_call_operand.hbm [shape: f32[32,32], index: 12, kind: input, shape index: {}]
  %s13 = inlined_call_operand.hbm [shape: f32[1,32], index: 13, kind: input, shape index: {}]
  %s14 = inlined_call_operand.vmem [shape: f32[6,32], index: 14, kind: input, shape index: {}]
  %s15 = inlined_call_operand.vmem [shape: f32[32,11], index: 15, kind: input, shape index: {}]
  %s16 = inlined_call_operand.vmem [shape: f32[1,11], index: 16, kind: input, shape index: {}]
  %s17 = inlined_call_operand.hbm [shape: f32[6,11], index: 17, kind: input, shape index: {}]
  %s18 = inlined_call_operand.hbm [shape: f32[6,32], index: 18, kind: output, shape index: {0}]
  %s19 = inlined_call_operand.hbm [shape: f32[1,32], index: 19, kind: output, shape index: {1}]
  %s20 = inlined_call_operand.hbm [shape: f32[1,128], index: 20, kind: output, shape index: {2}]
  %21 = xla_tuple %s18, %s19, %s20
  %s22 = sld [smem:[#allocation0]]
  $region146: #{tpu_custom_call.1} parent=0
    _
  %s24 = ssub.s32 1, %s22
  %s25 = scalar_select 0, %s24, %s22
  $region1: #{tpu_custom_call.1} parent=0
    #allocation2 [shape = 'u8[4096]{0}', space=vmem, size = 0x1000, scoped, tag = 'input window, operand 0, single buffered']
    #allocation3 [shape = 's32[1]{0}', space=sflag, size = 0x4, scoped, tag = 'scoped memory for tpu_custom_call.1']
    #allocation4 [shape = 's32[1]{0}', space=sflag, size = 0x4, scoped, tag = 'scoped memory for tpu_custom_call.1']
    #allocation5 [shape = 'u8[4096]{0}', space=vmem, size = 0x1000, scoped, tag = 'input window, operand 1, single buffered']
    #allocation6 [shape = 's32[1]{0}', space=sflag, size = 0x4, scoped, tag = 'scoped memory for tpu_custom_call.1']
    #allocation7 [shape = 'u8[8192]{0}', space=vmem, size = 0x2000, scoped, tag = 'input window, operand 2, single buffered']
    #allocation8 [shape = 'u8[512]{0}', space=vmem, size = 0x400, scoped, tag = 'input window, operand 3, single buffered']
    #allocation9 [shape = 's32[1]{0}', space=sflag, size = 0x4, scoped, tag = 'scoped memory for tpu_custom_call.1']
    #allocation10 [shape = 'u8[512]{0}', space=vmem, size = 0x400, scoped, tag = 'input window, operand 5, single buffered']
    #allocation11 [shape = 'u8[4096]{0}', space=vmem, size = 0x1000, scoped, tag = 'input window, operand 6, single buffered']
    #allocation12 [shape = 's32[1]{0}', space=sflag, size = 0x4, scoped, tag = 'scoped memory for tpu_custom_call.1']
    #allocation13 [shape = 'u8[4096]{0}', space=vmem, size = 0x1000, scoped, tag = 'input window, operand 7, single buffered']
    #allocation14 [shape = 'u8[8192]{0}', space=vmem, size = 0x2000, scoped, tag = 'input window, operand 8, single buffered']
    #allocation15 [shape = 's32[1]{0}', space=sflag, size = 0x4, scoped, tag = 'scoped memory for tpu_custom_call.1']
    #allocation16 [shape = 'u8[512]{0}', space=vmem, size = 0x400, scoped, tag = 'input window, operand 9, single buffered']
    #allocation17 [shape = 'u8[16384]{0}', space=vmem, size = 0x4000, scoped, tag = 'input window, operand 12, single buffered']
    #allocation18 [shape = 's32[1]{0}', space=sflag, size = 0x4, scoped, tag = 'scoped memory for tpu_custom_call.1']
    #allocation19 [shape = 'u8[512]{0}', space=vmem, size = 0x400, scoped, tag = 'input window, operand 13, single buffered']
    #allocation20 [shape = 'u8[4096]{0}', space=vmem, size = 0x1000, scoped, tag = 'input window, operand 17, single buffered']
    #allocation21 [shape = 's32[1]{0}', space=sflag, size = 0x4, scoped, tag = 'scoped memory for tpu_custom_call.1']
    #allocation22 [shape = 'u8[4096]{0}', space=vmem, size = 0x1000, scoped, tag = 'output window, operand 0, single buffered']
    #allocation23 [shape = 'u8[512]{0}', space=vmem, size = 0x400, scoped, tag = 'output window, operand 1, single buffered']
    #allocation24 [shape = 's32[1]{0}', space=sflag, size = 0x4, scoped, tag = 'scoped memory for tpu_custom_call.1']
    #allocation25 [shape = 'u8[512]{0}', space=vmem, size = 0x400, scoped, tag = 'output window, operand 2, single buffered']
    %26 = vsyncpa [#allocation3], 0
    %27 = vsyncpa [#allocation6], 0
    %28 = vsyncpa [#allocation9], 0
    %29 = vsyncpa [#allocation12], 0
    %30 = vsyncpa [#allocation15], 0
    %31 = vsyncpa [#allocation18], 0
    %32 = vsyncpa [#allocation21], 0
    %33 = vsyncpa [#allocation4], 0
    %34 = vsyncpa [#allocation24], 0
    // Predicated region
    $region2: #{tpu_custom_call.1} parent=1 // pred_check
      _
    $region3: #{tpu_custom_call.1} parent=1 // pred_check_branch
      %36 = sbr.rel (0) target = $region5
    $region4: #{tpu_custom_call.1} parent=1 // pred_region
      %s38 = ssub.s32 128, 128
      %39 = vsyncadd [#allocation3], %s38
      %s41 = sshll.u32 [#allocation2], 4
      %s42 = int_to_ptr.vmem [resolvable:$true] %s41
      %44 = dma.hbm_to_vmem [thread:$0]  %s0, 128, %s42, [#allocation3]
    $region5: #{tpu_custom_call.1} parent=1 // pred_fallthru
      _
    // Predicated region
    $region6: #{tpu_custom_call.1} parent=1 // pred_check
      _
    $region7: #{tpu_custom_call.1} parent=1 // pred_check_branch
      %46 = sbr.rel (0) target = $region9
    $region8: #{tpu_custom_call.1} parent=1 // pred_region
      %s48 = ssub.s32 128, 128
      %49 = vsyncadd [#allocation6], %s48
      %s51 = sshll.u32 [#allocation5], 4
      %s52 = int_to_ptr.vmem [resolvable:$true] %s51
      %54 = dma.hbm_to_vmem [thread:$0]  %s1, 128, %s52, [#allocation6]
    $region9: #{tpu_custom_call.1} parent=1 // pred_fallthru
      _
    // Predicated region
    $region10: #{tpu_custom_call.1} parent=1 // pred_check
      _
    $region11: #{tpu_custom_call.1} parent=1 // pred_check_branch
      %56 = sbr.rel (0) target = $region13
    $region12: #{tpu_custom_call.1} parent=1 // pred_region
      %s58 = ssub.s32 256, 256
      %59 = vsyncadd [#allocation6], %s58
      %s60 = sshll.u32 [#allocation7], 4
      %s61 = int_to_ptr.vmem [resolvable:$true] %s60
      %66 = dma.hbm_to_vmem [thread:$0]  %s2, 256, %s61, [#allocation6], 128, 128, 8
    $region13: #{tpu_custom_call.1} parent=1 // pred_fallthru
      _
    // Predicated region
    $region14: #{tpu_custom_call.1} parent=1 // pred_check
      _
    $region15: #{tpu_custom_call.1} parent=1 // pred_check_branch
      %68 = sbr.rel (0) target = $region17
    $region16: #{tpu_custom_call.1} parent=1 // pred_region
      %s70 = ssub.s32 16, 16
      %71 = vsyncadd [#allocation9], %s70
      %s73 = sshll.u32 [#allocation8], 4
      %s74 = int_to_ptr.vmem [resolvable:$true] %s73
      %76 = dma.hbm_to_vmem [thread:$0]  %s3, 16, %s74, [#allocation9]
    $region17: #{tpu_custom_call.1} parent=1 // pred_fallthru
      _
    // Predicated region
    $region18: #{tpu_custom_call.1} parent=1 // pred_check
      _
    $region19: #{tpu_custom_call.1} parent=1 // pred_check_branch
      %78 = sbr.rel (0) target = $region21
    $region20: #{tpu_custom_call.1} parent=1 // pred_region
      _
    $region21: #{tpu_custom_call.1} parent=1 // pred_fallthru
      _
    // Predicated region
    $region22: #{tpu_custom_call.1} parent=1 // pred_check
      _
    $region23: #{tpu_custom_call.1} parent=1 // pred_check_branch
      %80 = sbr.rel (0) target = $region25
    $region24: #{tpu_custom_call.1} parent=1 // pred_region
      %s82 = ssub.s32 16, 16
      %83 = vsyncadd [#allocation9], %s82
      %s85 = sshll.u32 [#allocation10], 4
      %s86 = int_to_ptr.vmem [resolvable:$true] %s85
      %88 = dma.hbm_to_vmem [thread:$0]  %s5, 16, %s86, [#allocation9]
    $region25: #{tpu_custom_call.1} parent=1 // pred_fallthru
      _
    // Predicated region
    $region26: #{tpu_custom_call.1} parent=1 // pred_check
      _
    $region27: #{tpu_custom_call.1} parent=1 // pred_check_branch
      %90 = sbr.rel (0) target = $region29
    $region28: #{tpu_custom_call.1} parent=1 // pred_region
      %s92 = ssub.s32 128, 128
      %93 = vsyncadd [#allocation12], %s92
      %s95 = sshll.u32 [#allocation11], 4
      %s96 = int_to_ptr.vmem [resolvable:$true] %s95
      %98 = dma.hbm_to_vmem [thread:$0]  %s6, 128, %s96, [#allocation12]
    $region29: #{tpu_custom_call.1} parent=1 // pred_fallthru
      _
    // Predicated region
    $region30: #{tpu_custom_call.1} parent=1 // pred_check
      _
    $region31: #{tpu_custom_call.1} parent=1 // pred_check_branch
      %100 = sbr.rel (0) target = $region33
    $region32: #{tpu_custom_call.1} parent=1 // pred_region
      %s102 = ssub.s32 128, 128
      %103 = vsyncadd [#allocation12], %s102
      %s105 = sshll.u32 [#allocation13], 4
      %s106 = int_to_ptr.vmem [resolvable:$true] %s105
      %108 = dma.hbm_to_vmem [thread:$0]  %s7, 128, %s106, [#allocation12]
    $region33: #{tpu_custom_call.1} parent=1 // pred_fallthru
      _
    // Predicated region
    $region34: #{tpu_custom_call.1} parent=1 // pred_check
      _
    $region35: #{tpu_custom_call.1} parent=1 // pred_check_branch
      %110 = sbr.rel (0) target = $region37
    $region36: #{tpu_custom_call.1} parent=1 // pred_region
      %s112 = ssub.s32 256, 256
      %113 = vsyncadd [#allocation15], %s112
      %s114 = sshll.u32 [#allocation14], 4
      %s115 = int_to_ptr.vmem [resolvable:$true] %s114
      %120 = dma.hbm_to_vmem [thread:$0]  %s8, 256, %s115, [#allocation15], 128, 128, 8
    $region37: #{tpu_custom_call.1} parent=1 // pred_fallthru
      _
    // Predicated region
    $region38: #{tpu_custom_call.1} parent=1 // pred_check
      _
    $region39: #{tpu_custom_call.1} parent=1 // pred_check_branch
      %122 = sbr.rel (0) target = $region41
    $region40: #{tpu_custom_call.1} parent=1 // pred_region
      %s124 = ssub.s32 16, 16
      %125 = vsyncadd [#allocation15], %s124
      %s127 = sshll.u32 [#allocation16], 4
      %s128 = int_to_ptr.vmem [resolvable:$true] %s127
      %130 = dma.hbm_to_vmem [thread:$0]  %s9, 16, %s128, [#allocation15]
    $region41: #{tpu_custom_call.1} parent=1 // pred_fallthru
      _
    // Predicated region
    $region42: #{tpu_custom_call.1} parent=1 // pred_check
      _
    $region43: #{tpu_custom_call.1} parent=1 // pred_check_branch
      %132 = sbr.rel (0) target = $region45
    $region44: #{tpu_custom_call.1} parent=1 // pred_region
      _
    $region45: #{tpu_custom_call.1} parent=1 // pred_fallthru
      _
    // Predicated region
    $region46: #{tpu_custom_call.1} parent=1 // pred_check
      _
    $region47: #{tpu_custom_call.1} parent=1 // pred_check_branch
      %134 = sbr.rel (0) target = $region49
    $region48: #{tpu_custom_call.1} parent=1 // pred_region
      _
    $region49: #{tpu_custom_call.1} parent=1 // pred_fallthru
      _
    // Predicated region
    $region50: #{tpu_custom_call.1} parent=1 // pred_check
      _
    $region51: #{tpu_custom_call.1} parent=1 // pred_check_branch
      %136 = sbr.rel (0) target = $region53
    $region52: #{tpu_custom_call.1} parent=1 // pred_region
      %s138 = ssub.s32 512, 512
      %139 = vsyncadd [#allocation18], %s138
      %s140 = sshll.u32 [#allocation17], 4
      %s141 = int_to_ptr.vmem [resolvable:$true] %s140
      %146 = dma.hbm_to_vmem [thread:$0]  %s12, 512, %s141, [#allocation18], 128, 128, 8
    $region53: #{tpu_custom_call.1} parent=1 // pred_fallthru
      _
    // Predicated region
    $region54: #{tpu_custom_call.1} parent=1 // pred_check
      _
    $region55: #{tpu_custom_call.1} parent=1 // pred_check_branch
      %148 = sbr.rel (0) target = $region57
    $region56: #{tpu_custom_call.1} parent=1 // pred_region
      %s150 = ssub.s32 16, 16
      %151 = vsyncadd [#allocation18], %s150
      %s153 = sshll.u32 [#allocation19], 4
      %s154 = int_to_ptr.vmem [resolvable:$true] %s153
      %156 = dma.hbm_to_vmem [thread:$0]  %s13, 16, %s154, [#allocation18]
    $region57: #{tpu_custom_call.1} parent=1 // pred_fallthru
      _
    // Predicated region
    $region58: #{tpu_custom_call.1} parent=1 // pred_check
      _
    $region59: #{tpu_custom_call.1} parent=1 // pred_check_branch
      %158 = sbr.rel (0) target = $region61
    $region60: #{tpu_custom_call.1} parent=1 // pred_region
      _
    $region61: #{tpu_custom_call.1} parent=1 // pred_fallthru
      _
    // Predicated region
    $region62: #{tpu_custom_call.1} parent=1 // pred_check
      _
    $region63: #{tpu_custom_call.1} parent=1 // pred_check_branch
      %160 = sbr.rel (0) target = $region65
    $region64: #{tpu_custom_call.1} parent=1 // pred_region
      _
    $region65: #{tpu_custom_call.1} parent=1 // pred_fallthru
      _
    // Predicated region
    $region66: #{tpu_custom_call.1} parent=1 // pred_check
      _
    $region67: #{tpu_custom_call.1} parent=1 // pred_check_branch
      %162 = sbr.rel (0) target = $region69
    $region68: #{tpu_custom_call.1} parent=1 // pred_region
      _
    $region69: #{tpu_custom_call.1} parent=1 // pred_fallthru
      _
    // Predicated region
    $region70: #{tpu_custom_call.1} parent=1 // pred_check
      _
    $region71: #{tpu_custom_call.1} parent=1 // pred_check_branch
      %164 = sbr.rel (0) target = $region73
    $region72: #{tpu_custom_call.1} parent=1 // pred_region
      %s166 = ssub.s32 128, 128
      %167 = vsyncadd [#allocation21], %s166
      %s169 = sshll.u32 [#allocation20], 4
      %s170 = int_to_ptr.vmem [resolvable:$true] %s169
      %172 = dma.hbm_to_vmem [thread:$0]  %s17, 128, %s170, [#allocation21]
    $region73: #{tpu_custom_call.1} parent=1 // pred_fallthru
      _
    // Predicated region
    $region74: #{tpu_custom_call.1} parent=1 // pred_check
      _
    $region75: #{tpu_custom_call.1} parent=1 // pred_check_branch
      %174 = sbr.rel (0) target = $region77
    $region76: #{tpu_custom_call.1} parent=1 // pred_region
      %175 = dma.done [#allocation3], 128
    $region77: #{tpu_custom_call.1} parent=1 // pred_fallthru
      _
    // Predicated region
    $region78: #{tpu_custom_call.1} parent=1 // pred_check
      _
    $region79: #{tpu_custom_call.1} parent=1 // pred_check_branch
      %177 = sbr.rel (0) target = $region81
    $region80: #{tpu_custom_call.1} parent=1 // pred_region
      %178 = dma.done [#allocation6], 128
    $region81: #{tpu_custom_call.1} parent=1 // pred_fallthru
      _
    // Predicated region
    $region82: #{tpu_custom_call.1} parent=1 // pred_check
      _
    $region83: #{tpu_custom_call.1} parent=1 // pred_check_branch
      %180 = sbr.rel (0) target = $region85
    $region84: #{tpu_custom_call.1} parent=1 // pred_region
      %181 = dma.done [#allocation6], 256
    $region85: #{tpu_custom_call.1} parent=1 // pred_fallthru
      _
    // Predicated region
    $region86: #{tpu_custom_call.1} parent=1 // pred_check
      _
    $region87: #{tpu_custom_call.1} parent=1 // pred_check_branch
      %183 = sbr.rel (0) target = $region89
    $region88: #{tpu_custom_call.1} parent=1 // pred_region
      %184 = dma.done [#allocation9], 16
    $region89: #{tpu_custom_call.1} parent=1 // pred_fallthru
      _
    // Predicated region
    $region90: #{tpu_custom_call.1} parent=1 // pred_check
      _
    $region91: #{tpu_custom_call.1} parent=1 // pred_check_branch
      %186 = sbr.rel (0) target = $region93
    $region92: #{tpu_custom_call.1} parent=1 // pred_region
      %187 = dma.done [#allocation9], 16
    $region93: #{tpu_custom_call.1} parent=1 // pred_fallthru
      _
    // Predicated region
    $region94: #{tpu_custom_call.1} parent=1 // pred_check
      _
    $region95: #{tpu_custom_call.1} parent=1 // pred_check_branch
      %189 = sbr.rel (0) target = $region97
    $region96: #{tpu_custom_call.1} parent=1 // pred_region
      %190 = dma.done [#allocation12], 128
    $region97: #{tpu_custom_call.1} parent=1 // pred_fallthru
      _
    // Predicated region
    $region98: #{tpu_custom_call.1} parent=1 // pred_check
      _
    $region99: #{tpu_custom_call.1} parent=1 // pred_check_branch
      %192 = sbr.rel (0) target = $region101
    $region100: #{tpu_custom_call.1} parent=1 // pred_region
      %193 = dma.done [#allocation12], 128
    $region101: #{tpu_custom_call.1} parent=1 // pred_fallthru
      _
    // Predicated region
    $region102: #{tpu_custom_call.1} parent=1 // pred_check
      _
    $region103: #{tpu_custom_call.1} parent=1 // pred_check_branch
      %195 = sbr.rel (0) target = $region105
    $region104: #{tpu_custom_call.1} parent=1 // pred_region
      %196 = dma.done [#allocation15], 256
    $region105: #{tpu_custom_call.1} parent=1 // pred_fallthru
      _
    // Predicated region
    $region106: #{tpu_custom_call.1} parent=1 // pred_check
      _
    $region107: #{tpu_custom_call.1} parent=1 // pred_check_branch
      %198 = sbr.rel (0) target = $region109
    $region108: #{tpu_custom_call.1} parent=1 // pred_region
      %199 = dma.done [#allocation15], 16
    $region109: #{tpu_custom_call.1} parent=1 // pred_fallthru
      _
    // Predicated region
    $region110: #{tpu_custom_call.1} parent=1 // pred_check
      _
    $region111: #{tpu_custom_call.1} parent=1 // pred_check_branch
      %201 = sbr.rel (0) target = $region113
    $region112: #{tpu_custom_call.1} parent=1 // pred_region
      %202 = dma.done [#allocation18], 512
    $region113: #{tpu_custom_call.1} parent=1 // pred_fallthru
      _
    // Predicated region
    $region114: #{tpu_custom_call.1} parent=1 // pred_check
      _
    $region115: #{tpu_custom_call.1} parent=1 // pred_check_branch
      %204 = sbr.rel (0) target = $region117
    $region116: #{tpu_custom_call.1} parent=1 // pred_region
      %205 = dma.done [#allocation18], 16
    $region117: #{tpu_custom_call.1} parent=1 // pred_fallthru
      _
    // Predicated region
    $region118: #{tpu_custom_call.1} parent=1 // pred_check
      _
    $region119: #{tpu_custom_call.1} parent=1 // pred_check_branch
      %207 = sbr.rel (0) target = $region121
    $region120: #{tpu_custom_call.1} parent=1 // pred_region
      %208 = dma.done [#allocation21], 128
    $region121: #{tpu_custom_call.1} parent=1 // pred_fallthru
      _
    %v209 = vld [vmem:[#allocation5] sm:$0xff]
    %v210 = vld [vmem:[#allocation2] sm:$0xff]
    %v211 = vld [vmem:[#allocation7] sm:$0xff]
    %v212 = vld [vmem:[#allocation7 + $0x8] sm:$0x7f]
    %vm213 = vcmask 121856
    %v215 = vsel %vm213, %v210, 0
    %vm217 = vcmask 1046528
    %v219 = vsel %vm217, %v212, 0
    %221 = vmatprep.subr.mxu0 0.0
    %222 = vmatpush1.msra.mxu0 0.0
    %223 = vmatprep.subr.mxu0 0.0
    %224 = vmatpush1.msra.mxu0 0.0
    %225 = vmatprep.subr.mxu0 0.0
    %226 = vmatpush1.msra.mxu0 0.0
    %227 = vmatprep.subr.mxu0 0.0
    %228 = vmatpush1.msra.mxu0 0.0
    %229 = vmatprep.subr.mxu0 0.0
    %230 = vmatpush1.msra.mxu0 0.0
    %231 = vmatprep.subr.mxu0 0.0
    %232 = vmatpush1.msra.mxu0 0.0
    %233 = vmatprep.subr.mxu0 0.0
    %234 = vmatpush1.msra.mxu0 0.0
    %235 = vmatprep.subr.mxu0 0.0
    %236 = vmatpush1.msra.mxu0 0.0
    %237 = vmatprep.subr.mxu0 0.0
    %238 = vmatpush1.msra.mxu0 0.0
    %239 = vmatprep.subr.mxu0 0.0
    %240 = vmatpush1.msra.mxu0 0.0
    %241 = vmatprep.subr.mxu0 0.0
    %242 = vmatpush1.msra.mxu0 0.0
    %243 = vmatprep.subr.mxu0 0.0
    %244 = vmatpush1.msra.mxu0 0.0
    %245 = vmatprep.subr.mxu0 0.0
    %246 = vmatpush1.msra.mxu0 0.0
    %247 = vmatprep.subr.mxu0 0.0
    %248 = vmatpush1.msra.mxu0 0.0
    %249 = vmatprep.subr.mxu0 0.0
    %250 = vmatpush1.msra.mxu0 %v219
    %251 = vmatprep.subr.mxu0 0.0
    %252 = vmatpush1.msra.mxu0 %v211
    %253 = vmatprep.subr.mxu0 0.0
    %254 = vmatpush2.msra.mxu0 0.0
    %255 = vmatprep.subr.mxu0 0.0
    %256 = vmatpush2.msra.mxu0 0.0
    %257 = vmatprep.subr.mxu0 0.0
    %258 = vmatpush2.msra.mxu0 0.0
    %259 = vmatprep.subr.mxu0 0.0
    %260 = vmatpush2.msra.mxu0 0.0
    %261 = vmatprep.subr.mxu0 0.0
    %262 = vmatpush2.msra.mxu0 0.0
    %263 = vmatprep.subr.mxu0 0.0
    %264 = vmatpush2.msra.mxu0 0.0
    %265 = vmatprep.subr.mxu0 0.0
    %266 = vmatpush2.msra.mxu0 0.0
    %267 = vmatprep.subr.mxu0 0.0
    %268 = vmatpush2.msra.mxu0 0.0
    %269 = vmatprep.subr.mxu0 0.0
    %270 = vmatpush2.msra.mxu0 0.0
    %271 = vmatprep.subr.mxu0 0.0
    %272 = vmatpush2.msra.mxu0 0.0
    %273 = vmatprep.subr.mxu0 0.0
    %274 = vmatpush2.msra.mxu0 0.0
    %275 = vmatprep.subr.mxu0 0.0
    %276 = vmatpush2.msra.mxu0 0.0
    %277 = vmatprep.subr.mxu0 0.0
    %278 = vmatpush2.msra.mxu0 0.0
    %279 = vmatprep.subr.mxu0 0.0
    %280 = vmatpush2.msra.mxu0 0.0
    %281 = vmatprep.subr.mxu0 0.0
    %282 = vmatpush2.msra.mxu0 0.0
    %283 = vmatprep.subr.mxu0 0.0
    %284 = vmatpush2.msra.mxu0 0.0
    %285 = vmatprep.mubr.f32.mxu0 0.0
    %286 = vmatmul.mubr.f32.gmra.mxu0 %v215
    %v287 = vpop.f32.mrf.mxu0
    %v288 = vadd.f32 0.0, %v287
    %v289 = vpop.f32.mrf.mxu0
    %290 = vdwg.mxu0
    %v291 = vld [vmem:[#allocation8] sm:$0x1]
    %v293 = vlaneseq
    %v294 = vshrl.u32 %v293, 7
    %v295 = vsub.s32 0, %v294
    %v296 = vrot.slane %v291, %v295
    %vm298 = vcmask 64512
    %v300 = vsel %vm298, %v209, 0
    %302 = vmatprep.subr.mxu0 0.0
    %303 = vmatpush1.msra.mxu0 0.0
    %304 = vmatprep.subr.mxu0 0.0
    %305 = vmatpush1.msra.mxu0 0.0
    %306 = vmatprep.subr.mxu0 0.0
    %307 = vmatpush1.msra.mxu0 0.0
    %308 = vmatprep.subr.mxu0 0.0
    %309 = vmatpush1.msra.mxu0 0.0
    %310 = vmatprep.subr.mxu0 0.0
    %311 = vmatpush1.msra.mxu0 0.0
    %312 = vmatprep.subr.mxu0 0.0
    %313 = vmatpush1.msra.mxu0 0.0
    %314 = vmatprep.subr.mxu0 0.0
    %315 = vmatpush1.msra.mxu0 0.0
    %316 = vmatprep.subr.mxu0 0.0
    %317 = vmatpush1.msra.mxu0 0.0
    %318 = vmatprep.subr.mxu0 0.0
    %319 = vmatpush1.msra.mxu0 0.0
    %320 = vmatprep.subr.mxu0 0.0
    %321 = vmatpush1.msra.mxu0 0.0
    %322 = vmatprep.subr.mxu0 0.0
    %323 = vmatpush1.msra.mxu0 0.0
    %324 = vmatprep.subr.mxu0 0.0
    %325 = vmatpush1.msra.mxu0 0.0
    %326 = vmatprep.subr.mxu0 0.0
    %327 = vmatpush1.msra.mxu0 0.0
    %328 = vmatprep.subr.mxu0 0.0
    %329 = vmatpush1.msra.mxu0 0.0
    %330 = vmatprep.subr.mxu0 0.0
    %331 = vmatpush1.msra.mxu0 0.0
    %332 = vmatprep.subr.mxu0 0.0
    %333 = vmatpush1.msra.mxu0 %v288
    %334 = vmatprep.subr.mxu0 0.0
    %335 = vmatpush2.msra.mxu0 0.0
    %336 = vmatprep.subr.mxu0 0.0
    %337 = vmatpush2.msra.mxu0 0.0
    %338 = vmatprep.subr.mxu0 0.0
    %339 = vmatpush2.msra.mxu0 0.0
    %340 = vmatprep.subr.mxu0 0.0
    %341 = vmatpush2.msra.mxu0 0.0
    %342 = vmatprep.subr.mxu0 0.0
    %343 = vmatpush2.msra.mxu0 0.0
    %344 = vmatprep.subr.mxu0 0.0
    %345 = vmatpush2.msra.mxu0 0.0
    %346 = vmatprep.subr.mxu0 0.0
    %347 = vmatpush2.msra.mxu0 0.0
    %348 = vmatprep.subr.mxu0 0.0
    %349 = vmatpush2.msra.mxu0 0.0
    %350 = vmatprep.subr.mxu0 0.0
    %351 = vmatpush2.msra.mxu0 0.0
    %352 = vmatprep.subr.mxu0 0.0
    %353 = vmatpush2.msra.mxu0 0.0
    %354 = vmatprep.subr.mxu0 0.0
    %355 = vmatpush2.msra.mxu0 0.0
    %356 = vmatprep.subr.mxu0 0.0
    %357 = vmatpush2.msra.mxu0 0.0
    %358 = vmatprep.subr.mxu0 0.0
    %359 = vmatpush2.msra.mxu0 0.0
    %360 = vmatprep.subr.mxu0 0.0
    %361 = vmatpush2.msra.mxu0 0.0
    %362 = vmatprep.subr.mxu0 0.0
    %363 = vmatpush2.msra.mxu0 0.0
    %364 = vmatprep.subr.mxu0 0.0
    %365 = vmatpush2.msra.mxu0 0.0
    %366 = vmatprep.mubr.f32.mxu0 0.0
    %367 = vmatmul.mubr.f32.gmra.mxu0 %v300
    %v368 = vpop.f32.mrf.mxu0
    %v369 = vadd.f32 %v296, %v368
    %v370 = vpop.f32.mrf.mxu0
    %371 = vdwg.mxu0
    %v372 = vmax.f32 %v369, 0.0
    %v373 = vld [vmem:[%s4] sm:$0xff]
    %v374 = vld [vmem:[%s4 + $0x8] sm:$0xff]
    %v375 = vld [vmem:[%s4 + $0x10] sm:$0xff]
    %v376 = vld [vmem:[%s4 + $0x18] sm:$0xff]
    %vm377 = vcmask 261120
    %v379 = vsel %vm377, %v372, 0
    %381 = vmatprep.subr.mxu0 0.0
    %382 = vmatpush1.msra.mxu0 0.0
    %383 = vmatprep.subr.mxu0 0.0
    %384 = vmatpush1.msra.mxu0 0.0
    %385 = vmatprep.subr.mxu0 0.0
    %386 = vmatpush1.msra.mxu0 0.0
    %387 = vmatprep.subr.mxu0 0.0
    %388 = vmatpush1.msra.mxu0 0.0
    %389 = vmatprep.subr.mxu0 0.0
    %390 = vmatpush1.msra.mxu0 0.0
    %391 = vmatprep.subr.mxu0 0.0
    %392 = vmatpush1.msra.mxu0 0.0
    %393 = vmatprep.subr.mxu0 0.0
    %394 = vmatpush1.msra.mxu0 0.0
    %395 = vmatprep.subr.mxu0 0.0
    %396 = vmatpush1.msra.mxu0 0.0
    %397 = vmatprep.subr.mxu0 0.0
    %398 = vmatpush1.msra.mxu0 0.0
    %399 = vmatprep.subr.mxu0 0.0
    %400 = vmatpush1.msra.mxu0 0.0
    %401 = vmatprep.subr.mxu0 0.0
    %402 = vmatpush1.msra.mxu0 0.0
    %403 = vmatprep.subr.mxu0 0.0
    %404 = vmatpush1.msra.mxu0 0.0
    %405 = vmatprep.subr.mxu0 0.0
    %406 = vmatpush1.msra.mxu0 %v376
    %407 = vmatprep.subr.mxu0 0.0
    %408 = vmatpush1.msra.mxu0 %v375
    %409 = vmatprep.subr.mxu0 0.0
    %410 = vmatpush1.msra.mxu0 %v374
    %411 = vmatprep.subr.mxu0 0.0
    %412 = vmatpush1.msra.mxu0 %v373
    %413 = vmatprep.subr.mxu0 0.0
    %414 = vmatpush2.msra.mxu0 0.0
    %415 = vmatprep.subr.mxu0 0.0
    %416 = vmatpush2.msra.mxu0 0.0
    %417 = vmatprep.subr.mxu0 0.0
    %418 = vmatpush2.msra.mxu0 0.0
    %419 = vmatprep.subr.mxu0 0.0
    %420 = vmatpush2.msra.mxu0 0.0
    %421 = vmatprep.subr.mxu0 0.0
    %422 = vmatpush2.msra.mxu0 0.0
    %423 = vmatprep.subr.mxu0 0.0
    %424 = vmatpush2.msra.mxu0 0.0
    %425 = vmatprep.subr.mxu0 0.0
    %426 = vmatpush2.msra.mxu0 0.0
    %427 = vmatprep.subr.mxu0 0.0
    %428 = vmatpush2.msra.mxu0 0.0
    %429 = vmatprep.subr.mxu0 0.0
    %430 = vmatpush2.msra.mxu0 0.0
    %431 = vmatprep.subr.mxu0 0.0
    %432 = vmatpush2.msra.mxu0 0.0
    %433 = vmatprep.subr.mxu0 0.0
    %434 = vmatpush2.msra.mxu0 0.0
    %435 = vmatprep.subr.mxu0 0.0
    %436 = vmatpush2.msra.mxu0 0.0
    %437 = vmatprep.subr.mxu0 0.0
    %438 = vmatpush2.msra.mxu0 0.0
    %439 = vmatprep.subr.mxu0 0.0
    %440 = vmatpush2.msra.mxu0 0.0
    %441 = vmatprep.subr.mxu0 0.0
    %442 = vmatpush2.msra.mxu0 0.0
    %443 = vmatprep.subr.mxu0 0.0
    %444 = vmatpush2.msra.mxu0 0.0
    %445 = vmatprep.mubr.f32.mxu0 0.0
    %446 = vmatmul.mubr.f32.gmra.mxu0 %v379
    %v447 = vpop.f32.mrf.mxu0
    %v448 = vadd.f32 0.0, %v447
    %v449 = vpop.f32.mrf.mxu0
    %450 = vdwg.mxu0
    %v451 = vld [vmem:[#allocation10] sm:$0x1]
    %v453 = vlaneseq
    %v454 = vshrl.u32 %v453, 7
    %v455 = vsub.s32 0, %v454
    %v456 = vrot.slane %v451, %v455
    %458 = vmatprep.subr.mxu0 0.0
    %459 = vmatpush1.msra.mxu0 0.0
    %460 = vmatprep.subr.mxu0 0.0
    %461 = vmatpush1.msra.mxu0 0.0
    %462 = vmatprep.subr.mxu0 0.0
    %463 = vmatpush1.msra.mxu0 0.0
    %464 = vmatprep.subr.mxu0 0.0
    %465 = vmatpush1.msra.mxu0 0.0
    %466 = vmatprep.subr.mxu0 0.0
    %467 = vmatpush1.msra.mxu0 0.0
    %468 = vmatprep.subr.mxu0 0.0
    %469 = vmatpush1.msra.mxu0 0.0
    %470 = vmatprep.subr.mxu0 0.0
    %471 = vmatpush1.msra.mxu0 0.0
    %472 = vmatprep.subr.mxu0 0.0
    %473 = vmatpush1.msra.mxu0 0.0
    %474 = vmatprep.subr.mxu0 0.0
    %475 = vmatpush1.msra.mxu0 0.0
    %476 = vmatprep.subr.mxu0 0.0
    %477 = vmatpush1.msra.mxu0 0.0
    %478 = vmatprep.subr.mxu0 0.0
    %479 = vmatpush1.msra.mxu0 0.0
    %480 = vmatprep.subr.mxu0 0.0
    %481 = vmatpush1.msra.mxu0 0.0
    %482 = vmatprep.subr.mxu0 0.0
    %483 = vmatpush1.msra.mxu0 0.0
    %484 = vmatprep.subr.mxu0 0.0
    %485 = vmatpush1.msra.mxu0 0.0
    %486 = vmatprep.subr.mxu0 0.0
    %487 = vmatpush1.msra.mxu0 0.0
    %488 = vmatprep.subr.mxu0 0.0
    %489 = vmatpush1.msra.mxu0 %v448
    %490 = vmatprep.subr.mxu0 0.0
    %491 = vmatpush2.msra.mxu0 0.0
    %492 = vmatprep.subr.mxu0 0.0
    %493 = vmatpush2.msra.mxu0 0.0
    %494 = vmatprep.subr.mxu0 0.0
    %495 = vmatpush2.msra.mxu0 0.0
    %496 = vmatprep.subr.mxu0 0.0
    %497 = vmatpush2.msra.mxu0 0.0
    %498 = vmatprep.subr.mxu0 0.0
    %499 = vmatpush2.msra.mxu0 0.0
    %500 = vmatprep.subr.mxu0 0.0
    %501 = vmatpush2.msra.mxu0 0.0
    %502 = vmatprep.subr.mxu0 0.0
    %503 = vmatpush2.msra.mxu0 0.0
    %504 = vmatprep.subr.mxu0 0.0
    %505 = vmatpush2.msra.mxu0 0.0
    %506 = vmatprep.subr.mxu0 0.0
    %507 = vmatpush2.msra.mxu0 0.0
    %508 = vmatprep.subr.mxu0 0.0
    %509 = vmatpush2.msra.mxu0 0.0
    %510 = vmatprep.subr.mxu0 0.0
    %511 = vmatpush2.msra.mxu0 0.0
    %512 = vmatprep.subr.mxu0 0.0
    %513 = vmatpush2.msra.mxu0 0.0
    %514 = vmatprep.subr.mxu0 0.0
    %515 = vmatpush2.msra.mxu0 0.0
    %516 = vmatprep.subr.mxu0 0.0
    %517 = vmatpush2.msra.mxu0 0.0
    %518 = vmatprep.subr.mxu0 0.0
    %519 = vmatpush2.msra.mxu0 0.0
    %520 = vmatprep.subr.mxu0 0.0
    %521 = vmatpush2.msra.mxu0 0.0
    %522 = vmatprep.mubr.f32.mxu0 0.0
    %523 = vmatmul.mubr.f32.gmra.mxu0 %v300
    %v524 = vpop.f32.mrf.mxu0
    %v525 = vadd.f32 %v456, %v524
    %v526 = vpop.f32.mrf.mxu0
    %527 = vdwg.mxu0
    %v528 = vsel %vm377, %v525, 0.0
    %v529 = vrot.slane %v528, 4
    %v530 = vadd.f32 %v528, %v529
    %v531 = vrot.slane %v530, 2
    %v532 = vadd.f32 %v530, %v531
    %v533 = vrot.slane %v532, 1
    %v534 = vadd.f32 %v532, %v533
    %v535 = vrcp.pop 8.0
    %v536 = vmul.f32 %v534, %v535
    %vm537 = vcmask 253952
    %538 = vst.msk [vmem:[#allocation23] sm:$0x1] %vm537, %v536
    %v539 = vld [vmem:[#allocation13] sm:$0x3f]
    %v540 = vld [vmem:[#allocation11] sm:$0x3f]
    %v541 = vld [vmem:[#allocation14] sm:$0xff]
    %v542 = vld [vmem:[#allocation14 + $0x8] sm:$0x7f]
    %v544 = vsel %vm213, %v540, 0
    %v547 = vsel %vm217, %v542, 0
    %549 = vmatprep.subr.mxu0 0.0
    %550 = vmatpush1.msra.mxu0 0.0
    %551 = vmatprep.subr.mxu0 0.0
    %552 = vmatpush1.msra.mxu0 0.0
    %553 = vmatprep.subr.mxu0 0.0
    %554 = vmatpush1.msra.mxu0 0.0
    %555 = vmatprep.subr.mxu0 0.0
    %556 = vmatpush1.msra.mxu0 0.0
    %557 = vmatprep.subr.mxu0 0.0
    %558 = vmatpush1.msra.mxu0 0.0
    %559 = vmatprep.subr.mxu0 0.0
    %560 = vmatpush1.msra.mxu0 0.0
    %561 = vmatprep.subr.mxu0 0.0
    %562 = vmatpush1.msra.mxu0 0.0
    %563 = vmatprep.subr.mxu0 0.0
    %564 = vmatpush1.msra.mxu0 0.0
    %565 = vmatprep.subr.mxu0 0.0
    %566 = vmatpush1.msra.mxu0 0.0
    %567 = vmatprep.subr.mxu0 0.0
    %568 = vmatpush1.msra.mxu0 0.0
    %569 = vmatprep.subr.mxu0 0.0
    %570 = vmatpush1.msra.mxu0 0.0
    %571 = vmatprep.subr.mxu0 0.0
    %572 = vmatpush1.msra.mxu0 0.0
    %573 = vmatprep.subr.mxu0 0.0
    %574 = vmatpush1.msra.mxu0 0.0
    %575 = vmatprep.subr.mxu0 0.0
    %576 = vmatpush1.msra.mxu0 0.0
    %577 = vmatprep.subr.mxu0 0.0
    %578 = vmatpush1.msra.mxu0 %v547
    %579 = vmatprep.subr.mxu0 0.0
    %580 = vmatpush1.msra.mxu0 %v541
    %581 = vmatprep.subr.mxu0 0.0
    %582 = vmatpush2.msra.mxu0 0.0
    %583 = vmatprep.subr.mxu0 0.0
    %584 = vmatpush2.msra.mxu0 0.0
    %585 = vmatprep.subr.mxu0 0.0
    %586 = vmatpush2.msra.mxu0 0.0
    %587 = vmatprep.subr.mxu0 0.0
    %588 = vmatpush2.msra.mxu0 0.0
    %589 = vmatprep.subr.mxu0 0.0
    %590 = vmatpush2.msra.mxu0 0.0
    %591 = vmatprep.subr.mxu0 0.0
    %592 = vmatpush2.msra.mxu0 0.0
    %593 = vmatprep.subr.mxu0 0.0
    %594 = vmatpush2.msra.mxu0 0.0
    %595 = vmatprep.subr.mxu0 0.0
    %596 = vmatpush2.msra.mxu0 0.0
    %597 = vmatprep.subr.mxu0 0.0
    %598 = vmatpush2.msra.mxu0 0.0
    %599 = vmatprep.subr.mxu0 0.0
    %600 = vmatpush2.msra.mxu0 0.0
    %601 = vmatprep.subr.mxu0 0.0
    %602 = vmatpush2.msra.mxu0 0.0
    %603 = vmatprep.subr.mxu0 0.0
    %604 = vmatpush2.msra.mxu0 0.0
    %605 = vmatprep.subr.mxu0 0.0
    %606 = vmatpush2.msra.mxu0 0.0
    %607 = vmatprep.subr.mxu0 0.0
    %608 = vmatpush2.msra.mxu0 0.0
    %609 = vmatprep.subr.mxu0 0.0
    %610 = vmatpush2.msra.mxu0 0.0
    %611 = vmatprep.subr.mxu0 0.0
    %612 = vmatpush2.msra.mxu0 0.0
    %613 = vmatprep.mubr.f32.mxu0 0.0
    %614 = vmatmul.mubr.f32.gmra.mxu0 %v544
    %v615 = vpop.f32.mrf.mxu0
    %v616 = vadd.f32 0.0, %v615
    %v617 = vpop.f32.mrf.mxu0
    %618 = vdwg.mxu0
    %v619 = vld [vmem:[#allocation16] sm:$0x1]
    %v621 = vlaneseq
    %v622 = vshrl.u32 %v621, 7
    %v623 = vsub.s32 0, %v622
    %v624 = vrot.slane %v619, %v623
    %vm626 = vcmask 48128
    %v628 = vsel %vm626, %v539, 0
    %vm630 = vcmask 1045504
    %v632 = vsel %vm630, %v616, 0
    %634 = vmatprep.subr.mxu0 0.0
    %635 = vmatpush1.msra.mxu0 0.0
    %636 = vmatprep.subr.mxu0 0.0
    %637 = vmatpush1.msra.mxu0 0.0
    %638 = vmatprep.subr.mxu0 0.0
    %639 = vmatpush1.msra.mxu0 0.0
    %640 = vmatprep.subr.mxu0 0.0
    %641 = vmatpush1.msra.mxu0 0.0
    %642 = vmatprep.subr.mxu0 0.0
    %643 = vmatpush1.msra.mxu0 0.0
    %644 = vmatprep.subr.mxu0 0.0
    %645 = vmatpush1.msra.mxu0 0.0
    %646 = vmatprep.subr.mxu0 0.0
    %647 = vmatpush1.msra.mxu0 0.0
    %648 = vmatprep.subr.mxu0 0.0
    %649 = vmatpush1.msra.mxu0 0.0
    %650 = vmatprep.subr.mxu0 0.0
    %651 = vmatpush1.msra.mxu0 0.0
    %652 = vmatprep.subr.mxu0 0.0
    %653 = vmatpush1.msra.mxu0 0.0
    %654 = vmatprep.subr.mxu0 0.0
    %655 = vmatpush1.msra.mxu0 0.0
    %656 = vmatprep.subr.mxu0 0.0
    %657 = vmatpush1.msra.mxu0 0.0
    %658 = vmatprep.subr.mxu0 0.0
    %659 = vmatpush1.msra.mxu0 0.0
    %660 = vmatprep.subr.mxu0 0.0
    %661 = vmatpush1.msra.mxu0 0.0
    %662 = vmatprep.subr.mxu0 0.0
    %663 = vmatpush1.msra.mxu0 0.0
    %664 = vmatprep.subr.mxu0 0.0
    %665 = vmatpush1.msra.mxu0 %v632
    %666 = vmatprep.subr.mxu0 0.0
    %667 = vmatpush2.msra.mxu0 0.0
    %668 = vmatprep.subr.mxu0 0.0
    %669 = vmatpush2.msra.mxu0 0.0
    %670 = vmatprep.subr.mxu0 0.0
    %671 = vmatpush2.msra.mxu0 0.0
    %672 = vmatprep.subr.mxu0 0.0
    %673 = vmatpush2.msra.mxu0 0.0
    %674 = vmatprep.subr.mxu0 0.0
    %675 = vmatpush2.msra.mxu0 0.0
    %676 = vmatprep.subr.mxu0 0.0
    %677 = vmatpush2.msra.mxu0 0.0
    %678 = vmatprep.subr.mxu0 0.0
    %679 = vmatpush2.msra.mxu0 0.0
    %680 = vmatprep.subr.mxu0 0.0
    %681 = vmatpush2.msra.mxu0 0.0
    %682 = vmatprep.subr.mxu0 0.0
    %683 = vmatpush2.msra.mxu0 0.0
    %684 = vmatprep.subr.mxu0 0.0
    %685 = vmatpush2.msra.mxu0 0.0
    %686 = vmatprep.subr.mxu0 0.0
    %687 = vmatpush2.msra.mxu0 0.0
    %688 = vmatprep.subr.mxu0 0.0
    %689 = vmatpush2.msra.mxu0 0.0
    %690 = vmatprep.subr.mxu0 0.0
    %691 = vmatpush2.msra.mxu0 0.0
    %692 = vmatprep.subr.mxu0 0.0
    %693 = vmatpush2.msra.mxu0 0.0
    %694 = vmatprep.subr.mxu0 0.0
    %695 = vmatpush2.msra.mxu0 0.0
    %696 = vmatprep.subr.mxu0 0.0
    %697 = vmatpush2.msra.mxu0 0.0
    %698 = vmatprep.mubr.f32.mxu0 0.0
    %699 = vmatmul.mubr.f32.gmra.mxu0 %v628
    %v700 = vpop.f32.mrf.mxu0
    %v701 = vadd.f32 %v624, %v700
    %v702 = vpop.f32.mrf.mxu0
    %703 = vdwg.mxu0
    %v704 = vmax.f32 %v701, 0.0
    %v705 = vld [vmem:[%s10] sm:$0xff]
    %v706 = vld [vmem:[%s10 + $0x8] sm:$0xff]
    %v707 = vld [vmem:[%s10 + $0x10] sm:$0xff]
    %v708 = vld [vmem:[%s10 + $0x18] sm:$0xff]
    %v710 = vsel %vm377, %v704, 0
    %712 = vmatprep.subr.mxu0 0.0
    %713 = vmatpush1.msra.mxu0 0.0
    %714 = vmatprep.subr.mxu0 0.0
    %715 = vmatpush1.msra.mxu0 0.0
    %716 = vmatprep.subr.mxu0 0.0
    %717 = vmatpush1.msra.mxu0 0.0
    %718 = vmatprep.subr.mxu0 0.0
    %719 = vmatpush1.msra.mxu0 0.0
    %720 = vmatprep.subr.mxu0 0.0
    %721 = vmatpush1.msra.mxu0 0.0
    %722 = vmatprep.subr.mxu0 0.0
    %723 = vmatpush1.msra.mxu0 0.0
    %724 = vmatprep.subr.mxu0 0.0
    %725 = vmatpush1.msra.mxu0 0.0
    %726 = vmatprep.subr.mxu0 0.0
    %727 = vmatpush1.msra.mxu0 0.0
    %728 = vmatprep.subr.mxu0 0.0
    %729 = vmatpush1.msra.mxu0 0.0
    %730 = vmatprep.subr.mxu0 0.0
    %731 = vmatpush1.msra.mxu0 0.0
    %732 = vmatprep.subr.mxu0 0.0
    %733 = vmatpush1.msra.mxu0 0.0
    %734 = vmatprep.subr.mxu0 0.0
    %735 = vmatpush1.msra.mxu0 0.0
    %736 = vmatprep.subr.mxu0 0.0
    %737 = vmatpush1.msra.mxu0 %v708
    %738 = vmatprep.subr.mxu0 0.0
    %739 = vmatpush1.msra.mxu0 %v707
    %740 = vmatprep.subr.mxu0 0.0
    %741 = vmatpush1.msra.mxu0 %v706
    %742 = vmatprep.subr.mxu0 0.0
    %743 = vmatpush1.msra.mxu0 %v705
    %744 = vmatprep.subr.mxu0 0.0
    %745 = vmatpush2.msra.mxu0 0.0
    %746 = vmatprep.subr.mxu0 0.0
    %747 = vmatpush2.msra.mxu0 0.0
    %748 = vmatprep.subr.mxu0 0.0
    %749 = vmatpush2.msra.mxu0 0.0
    %750 = vmatprep.subr.mxu0 0.0
    %751 = vmatpush2.msra.mxu0 0.0
    %752 = vmatprep.subr.mxu0 0.0
    %753 = vmatpush2.msra.mxu0 0.0
    %754 = vmatprep.subr.mxu0 0.0
    %755 = vmatpush2.msra.mxu0 0.0
    %756 = vmatprep.subr.mxu0 0.0
    %757 = vmatpush2.msra.mxu0 0.0
    %758 = vmatprep.subr.mxu0 0.0
    %759 = vmatpush2.msra.mxu0 0.0
    %760 = vmatprep.subr.mxu0 0.0
    %761 = vmatpush2.msra.mxu0 0.0
    %762 = vmatprep.subr.mxu0 0.0
    %763 = vmatpush2.msra.mxu0 0.0
    %764 = vmatprep.subr.mxu0 0.0
    %765 = vmatpush2.msra.mxu0 0.0
    %766 = vmatprep.subr.mxu0 0.0
    %767 = vmatpush2.msra.mxu0 0.0
    %768 = vmatprep.subr.mxu0 0.0
    %769 = vmatpush2.msra.mxu0 0.0
    %770 = vmatprep.subr.mxu0 0.0
    %771 = vmatpush2.msra.mxu0 0.0
    %772 = vmatprep.subr.mxu0 0.0
    %773 = vmatpush2.msra.mxu0 0.0
    %774 = vmatprep.subr.mxu0 0.0
    %775 = vmatpush2.msra.mxu0 0.0
    %776 = vmatprep.mubr.f32.mxu0 0.0
    %777 = vmatmul.mubr.f32.gmra.mxu0 %v710
    %v778 = vpop.f32.mrf.mxu0
    %v779 = vadd.f32 0.0, %v778
    %v780 = vpop.f32.mrf.mxu0
    %781 = vdwg.mxu0
    %v782 = vld [vmem:[%s11] sm:$0x1]
    %v784 = vlaneseq
    %v785 = vshrl.u32 %v784, 7
    %v786 = vsub.s32 0, %v785
    %v787 = vrot.slane %v782, %v786
    %v790 = vsel %vm630, %v779, 0
    %792 = vmatprep.subr.mxu0 0.0
    %793 = vmatpush1.msra.mxu0 0.0
    %794 = vmatprep.subr.mxu0 0.0
    %795 = vmatpush1.msra.mxu0 0.0
    %796 = vmatprep.subr.mxu0 0.0
    %797 = vmatpush1.msra.mxu0 0.0
    %798 = vmatprep.subr.mxu0 0.0
    %799 = vmatpush1.msra.mxu0 0.0
    %800 = vmatprep.subr.mxu0 0.0
    %801 = vmatpush1.msra.mxu0 0.0
    %802 = vmatprep.subr.mxu0 0.0
    %803 = vmatpush1.msra.mxu0 0.0
    %804 = vmatprep.subr.mxu0 0.0
    %805 = vmatpush1.msra.mxu0 0.0
    %806 = vmatprep.subr.mxu0 0.0
    %807 = vmatpush1.msra.mxu0 0.0
    %808 = vmatprep.subr.mxu0 0.0
    %809 = vmatpush1.msra.mxu0 0.0
    %810 = vmatprep.subr.mxu0 0.0
    %811 = vmatpush1.msra.mxu0 0.0
    %812 = vmatprep.subr.mxu0 0.0
    %813 = vmatpush1.msra.mxu0 0.0
    %814 = vmatprep.subr.mxu0 0.0
    %815 = vmatpush1.msra.mxu0 0.0
    %816 = vmatprep.subr.mxu0 0.0
    %817 = vmatpush1.msra.mxu0 0.0
    %818 = vmatprep.subr.mxu0 0.0
    %819 = vmatpush1.msra.mxu0 0.0
    %820 = vmatprep.subr.mxu0 0.0
    %821 = vmatpush1.msra.mxu0 0.0
    %822 = vmatprep.subr.mxu0 0.0
    %823 = vmatpush1.msra.mxu0 %v790
    %824 = vmatprep.subr.mxu0 0.0
    %825 = vmatpush2.msra.mxu0 0.0
    %826 = vmatprep.subr.mxu0 0.0
    %827 = vmatpush2.msra.mxu0 0.0
    %828 = vmatprep.subr.mxu0 0.0
    %829 = vmatpush2.msra.mxu0 0.0
    %830 = vmatprep.subr.mxu0 0.0
    %831 = vmatpush2.msra.mxu0 0.0
    %832 = vmatprep.subr.mxu0 0.0
    %833 = vmatpush2.msra.mxu0 0.0
    %834 = vmatprep.subr.mxu0 0.0
    %835 = vmatpush2.msra.mxu0 0.0
    %836 = vmatprep.subr.mxu0 0.0
    %837 = vmatpush2.msra.mxu0 0.0
    %838 = vmatprep.subr.mxu0 0.0
    %839 = vmatpush2.msra.mxu0 0.0
    %840 = vmatprep.subr.mxu0 0.0
    %841 = vmatpush2.msra.mxu0 0.0
    %842 = vmatprep.subr.mxu0 0.0
    %843 = vmatpush2.msra.mxu0 0.0
    %844 = vmatprep.subr.mxu0 0.0
    %845 = vmatpush2.msra.mxu0 0.0
    %846 = vmatprep.subr.mxu0 0.0
    %847 = vmatpush2.msra.mxu0 0.0
    %848 = vmatprep.subr.mxu0 0.0
    %849 = vmatpush2.msra.mxu0 0.0
    %850 = vmatprep.subr.mxu0 0.0
    %851 = vmatpush2.msra.mxu0 0.0
    %852 = vmatprep.subr.mxu0 0.0
    %853 = vmatpush2.msra.mxu0 0.0
    %854 = vmatprep.subr.mxu0 0.0
    %855 = vmatpush2.msra.mxu0 0.0
    %856 = vmatprep.mubr.f32.mxu0 0.0
    %857 = vmatmul.mubr.f32.gmra.mxu0 %v628
    %v858 = vpop.f32.mrf.mxu0
    %v859 = vadd.f32 %v787, %v858
    %v860 = vpop.f32.mrf.mxu0
    %861 = vdwg.mxu0
    %v862 = vld [vmem:[#allocation17] sm:$0xff]
    %v863 = vld [vmem:[#allocation17 + $0x8] sm:$0xff]
    %v864 = vld [vmem:[#allocation17 + $0x10] sm:$0xff]
    %v865 = vld [vmem:[#allocation17 + $0x18] sm:$0xff]
    %866 = vmatprep.subr.mxu0 0.0
    %867 = vmatpush1.msra.mxu0 0.0
    %868 = vmatprep.subr.mxu0 0.0
    %869 = vmatpush1.msra.mxu0 0.0
    %870 = vmatprep.subr.mxu0 0.0
    %871 = vmatpush1.msra.mxu0 0.0
    %872 = vmatprep.subr.mxu0 0.0
    %873 = vmatpush1.msra.mxu0 0.0
    %874 = vmatprep.subr.mxu0 0.0
    %875 = vmatpush1.msra.mxu0 0.0
    %876 = vmatprep.subr.mxu0 0.0
    %877 = vmatpush1.msra.mxu0 0.0
    %878 = vmatprep.subr.mxu0 0.0
    %879 = vmatpush1.msra.mxu0 0.0
    %880 = vmatprep.subr.mxu0 0.0
    %881 = vmatpush1.msra.mxu0 0.0
    %882 = vmatprep.subr.mxu0 0.0
    %883 = vmatpush1.msra.mxu0 0.0
    %884 = vmatprep.subr.mxu0 0.0
    %885 = vmatpush1.msra.mxu0 0.0
    %886 = vmatprep.subr.mxu0 0.0
    %887 = vmatpush1.msra.mxu0 0.0
    %888 = vmatprep.subr.mxu0 0.0
    %889 = vmatpush1.msra.mxu0 0.0
    %890 = vmatprep.subr.mxu0 0.0
    %891 = vmatpush1.msra.mxu0 %v865
    %892 = vmatprep.subr.mxu0 0.0
    %893 = vmatpush1.msra.mxu0 %v864
    %894 = vmatprep.subr.mxu0 0.0
    %895 = vmatpush1.msra.mxu0 %v863
    %896 = vmatprep.subr.mxu0 0.0
    %897 = vmatpush1.msra.mxu0 %v862
    %898 = vmatprep.subr.mxu0 0.0
    %899 = vmatpush2.msra.mxu0 0.0
    %900 = vmatprep.subr.mxu0 0.0
    %901 = vmatpush2.msra.mxu0 0.0
    %902 = vmatprep.subr.mxu0 0.0
    %903 = vmatpush2.msra.mxu0 0.0
    %904 = vmatprep.subr.mxu0 0.0
    %905 = vmatpush2.msra.mxu0 0.0
    %906 = vmatprep.subr.mxu0 0.0
    %907 = vmatpush2.msra.mxu0 0.0
    %908 = vmatprep.subr.mxu0 0.0
    %909 = vmatpush2.msra.mxu0 0.0
    %910 = vmatprep.subr.mxu0 0.0
    %911 = vmatpush2.msra.mxu0 0.0
    %912 = vmatprep.subr.mxu0 0.0
    %913 = vmatpush2.msra.mxu0 0.0
    %914 = vmatprep.subr.mxu0 0.0
    %915 = vmatpush2.msra.mxu0 0.0
    %916 = vmatprep.subr.mxu0 0.0
    %917 = vmatpush2.msra.mxu0 0.0
    %918 = vmatprep.subr.mxu0 0.0
    %919 = vmatpush2.msra.mxu0 0.0
    %920 = vmatprep.subr.mxu0 0.0
    %921 = vmatpush2.msra.mxu0 0.0
    %922 = vmatprep.subr.mxu0 0.0
    %923 = vmatpush2.msra.mxu0 0.0
    %924 = vmatprep.subr.mxu0 0.0
    %925 = vmatpush2.msra.mxu0 0.0
    %926 = vmatprep.subr.mxu0 0.0
    %927 = vmatpush2.msra.mxu0 0.0
    %928 = vmatprep.subr.mxu0 0.0
    %929 = vmatpush2.msra.mxu0 0.0
    %930 = vmatprep.mubr.f32.mxu0 0.0
    %931 = vmatmul.mubr.f32.gmra.mxu0 %v710
    %v932 = vpop.f32.mrf.mxu0
    %v933 = vadd.f32 0.0, %v932
    %v934 = vpop.f32.mrf.mxu0
    %935 = vdwg.mxu0
    %v936 = vld [vmem:[#allocation19] sm:$0x1]
    %v938 = vlaneseq
    %v939 = vshrl.u32 %v938, 7
    %v940 = vsub.s32 0, %v939
    %v941 = vrot.slane %v936, %v940
    %v944 = vsel %vm630, %v933, 0
    %946 = vmatprep.subr.mxu0 0.0
    %947 = vmatpush1.msra.mxu0 0.0
    %948 = vmatprep.subr.mxu0 0.0
    %949 = vmatpush1.msra.mxu0 0.0
    %950 = vmatprep.subr.mxu0 0.0
    %951 = vmatpush1.msra.mxu0 0.0
    %952 = vmatprep.subr.mxu0 0.0
    %953 = vmatpush1.msra.mxu0 0.0
    %954 = vmatprep.subr.mxu0 0.0
    %955 = vmatpush1.msra.mxu0 0.0
    %956 = vmatprep.subr.mxu0 0.0
    %957 = vmatpush1.msra.mxu0 0.0
    %958 = vmatprep.subr.mxu0 0.0
    %959 = vmatpush1.msra.mxu0 0.0
    %960 = vmatprep.subr.mxu0 0.0
    %961 = vmatpush1.msra.mxu0 0.0
    %962 = vmatprep.subr.mxu0 0.0
    %963 = vmatpush1.msra.mxu0 0.0
    %964 = vmatprep.subr.mxu0 0.0
    %965 = vmatpush1.msra.mxu0 0.0
    %966 = vmatprep.subr.mxu0 0.0
    %967 = vmatpush1.msra.mxu0 0.0
    %968 = vmatprep.subr.mxu0 0.0
    %969 = vmatpush1.msra.mxu0 0.0
    %970 = vmatprep.subr.mxu0 0.0
    %971 = vmatpush1.msra.mxu0 0.0
    %972 = vmatprep.subr.mxu0 0.0
    %973 = vmatpush1.msra.mxu0 0.0
    %974 = vmatprep.subr.mxu0 0.0
    %975 = vmatpush1.msra.mxu0 0.0
    %976 = vmatprep.subr.mxu0 0.0
    %977 = vmatpush1.msra.mxu0 %v944
    %978 = vmatprep.subr.mxu0 0.0
    %979 = vmatpush2.msra.mxu0 0.0
    %980 = vmatprep.subr.mxu0 0.0
    %981 = vmatpush2.msra.mxu0 0.0
    %982 = vmatprep.subr.mxu0 0.0
    %983 = vmatpush2.msra.mxu0 0.0
    %984 = vmatprep.subr.mxu0 0.0
    %985 = vmatpush2.msra.mxu0 0.0
    %986 = vmatprep.subr.mxu0 0.0
    %987 = vmatpush2.msra.mxu0 0.0
    %988 = vmatprep.subr.mxu0 0.0
    %989 = vmatpush2.msra.mxu0 0.0
    %990 = vmatprep.subr.mxu0 0.0
    %991 = vmatpush2.msra.mxu0 0.0
    %992 = vmatprep.subr.mxu0 0.0
    %993 = vmatpush2.msra.mxu0 0.0
    %994 = vmatprep.subr.mxu0 0.0
    %995 = vmatpush2.msra.mxu0 0.0
    %996 = vmatprep.subr.mxu0 0.0
    %997 = vmatpush2.msra.mxu0 0.0
    %998 = vmatprep.subr.mxu0 0.0
    %999 = vmatpush2.msra.mxu0 0.0
    %1000 = vmatprep.subr.mxu0 0.0
    %1001 = vmatpush2.msra.mxu0 0.0
    %1002 = vmatprep.subr.mxu0 0.0
    %1003 = vmatpush2.msra.mxu0 0.0
    %1004 = vmatprep.subr.mxu0 0.0
    %1005 = vmatpush2.msra.mxu0 0.0
    %1006 = vmatprep.subr.mxu0 0.0
    %1007 = vmatpush2.msra.mxu0 0.0
    %1008 = vmatprep.subr.mxu0 0.0
    %1009 = vmatpush2.msra.mxu0 0.0
    %1010 = vmatprep.mubr.f32.mxu0 0.0
    %1011 = vmatmul.mubr.f32.gmra.mxu0 %v628
    %v1012 = vpop.f32.mrf.mxu0
    %v1013 = vadd.f32 %v941, %v1012
    %v1014 = vpop.f32.mrf.mxu0
    %1015 = vdwg.mxu0
    %v1016 = vmax.f32 %v1013, 0.0
    %v1017 = vand.u32 2147483647, %v1013
    %v1018 = vsub.f32 0.0, %v1017
    %v1019 = vmul.f32 %v1018, 1.442695
    %v1020 = vpow.pop %v1019
    %v1021 = vadd.f32 %v1020, 1.0
    %v1022 = vlog2.pop %v1021
    %v1023 = vmul.f32 %v1022, 0.6931472
    %v1024 = vmul.f32 -0.5, %v1020
    %v1025 = vadd.f32 %v1024, 1.0
    %v1026 = vmul.f32 %v1025, %v1020
    %v1027 = vand.u32 2147483647, %v1020
    %vm1028 = vcmp.lt.f32.partialorder %v1027, 0.0004427343
    %v1029 = vsel %vm1028, %v1026, %v1023
    %v1030 = vadd.f32 %v1016, %v1029
    %v1031 = vadd.f32 %v1030, 0.1
    %v1032 = vld [vmem:[%s14] sm:$0x3f]
    %v1033 = vmul.f32 %v1031, %v1032
    %v1034 = vadd.f32 %v859, %v1033
    %vm1035 = vcmask 259072
    %1036 = vst.msk [vmem:[#allocation22] sm:$0x3f] %vm1035, %v1034
    %v1037 = vlog2.pop %v1031
    %v1038 = vmul.f32 %v1037, 0.6931472
    %v1039 = vmul.f32 %v859, %v859
    %v1040 = vadd.f32 %v1039, 1.0
    %v1041 = vmul.f32 %v1031, 2.0
    %v1042 = vmul.f32 %v1041, %v1031
    %v1043 = vrcp.pop %v1042
    %v1044 = vmul.f32 %v1040, %v1043
    %v1045 = vadd.f32 %v1038, %v1044
    %v1046 = vsub.f32 %v1045, 0.5
    %v1047 = vsel %vm1035, %v1046, 0.0
    %1048 = vadd.xlane.f32.xlu0 %v1047
    %v1049 = vpop.xlane.xlu0 %1048
    %v1050 = vrot.slane %v1049, 4
    %v1051 = vadd.f32 %v1049, %v1050
    %v1052 = vrot.slane %v1051, 2
    %v1053 = vadd.f32 %v1051, %v1052
    %v1054 = vrot.slane %v1053, 1
    %v1055 = vadd.f32 %v1053, %v1054
    %s1056 = vtos %v1055
    %v1057 = vstv %s1056
    %v1058 = vrcp.pop 192.0
    %v1059 = vmul.f32 %v1057, %v1058
    %v1060 = vld [vmem:[%s15] sm:$0xff]
    %v1061 = vld [vmem:[%s15 + $0x8] sm:$0xff]
    %v1062 = vld [vmem:[%s15 + $0x10] sm:$0xff]
    %v1063 = vld [vmem:[%s15 + $0x18] sm:$0xff]
    %v1064 = vld [vmem:[%s16] sm:$0x1]
    %v1066 = vlaneseq
    %v1067 = vshrl.u32 %v1066, 7
    %v1068 = vsub.s32 0, %v1067
    %v1069 = vrot.slane %v1064, %v1068
    %v1072 = vsel %vm377, %v1034, 0
    %1074 = vmatprep.subr.mxu0 0.0
    %1075 = vmatpush1.msra.mxu0 0.0
    %1076 = vmatprep.subr.mxu0 0.0
    %1077 = vmatpush1.msra.mxu0 0.0
    %1078 = vmatprep.subr.mxu0 0.0
    %1079 = vmatpush1.msra.mxu0 0.0
    %1080 = vmatprep.subr.mxu0 0.0
    %1081 = vmatpush1.msra.mxu0 0.0
    %1082 = vmatprep.subr.mxu0 0.0
    %1083 = vmatpush1.msra.mxu0 0.0
    %1084 = vmatprep.subr.mxu0 0.0
    %1085 = vmatpush1.msra.mxu0 0.0
    %1086 = vmatprep.subr.mxu0 0.0
    %1087 = vmatpush1.msra.mxu0 0.0
    %1088 = vmatprep.subr.mxu0 0.0
    %1089 = vmatpush1.msra.mxu0 0.0
    %1090 = vmatprep.subr.mxu0 0.0
    %1091 = vmatpush1.msra.mxu0 0.0
    %1092 = vmatprep.subr.mxu0 0.0
    %1093 = vmatpush1.msra.mxu0 0.0
    %1094 = vmatprep.subr.mxu0 0.0
    %1095 = vmatpush1.msra.mxu0 0.0
    %1096 = vmatprep.subr.mxu0 0.0
    %1097 = vmatpush1.msra.mxu0 0.0
    %1098 = vmatprep.subr.mxu0 0.0
    %1099 = vmatpush1.msra.mxu0 %v1063
    %1100 = vmatprep.subr.mxu0 0.0
    %1101 = vmatpush1.msra.mxu0 %v1062
    %1102 = vmatprep.subr.mxu0 0.0
    %1103 = vmatpush1.msra.mxu0 %v1061
    %1104 = vmatprep.subr.mxu0 0.0
    %1105 = vmatpush1.msra.mxu0 %v1060
    %1106 = vmatprep.subr.mxu0 0.0
    %1107 = vmatpush2.msra.mxu0 0.0
    %1108 = vmatprep.subr.mxu0 0.0
    %1109 = vmatpush2.msra.mxu0 0.0
    %1110 = vmatprep.subr.mxu0 0.0
    %1111 = vmatpush2.msra.mxu0 0.0
    %1112 = vmatprep.subr.mxu0 0.0
    %1113 = vmatpush2.msra.mxu0 0.0
    %1114 = vmatprep.subr.mxu0 0.0
    %1115 = vmatpush2.msra.mxu0 0.0
    %1116 = vmatprep.subr.mxu0 0.0
    %1117 = vmatpush2.msra.mxu0 0.0
    %1118 = vmatprep.subr.mxu0 0.0
    %1119 = vmatpush2.msra.mxu0 0.0
    %1120 = vmatprep.subr.mxu0 0.0
    %1121 = vmatpush2.msra.mxu0 0.0
    %1122 = vmatprep.subr.mxu0 0.0
    %1123 = vmatpush2.msra.mxu0 0.0
    %1124 = vmatprep.subr.mxu0 0.0
    %1125 = vmatpush2.msra.mxu0 0.0
    %1126 = vmatprep.subr.mxu0 0.0
    %1127 = vmatpush2.msra.mxu0 0.0
    %1128 = vmatprep.subr.mxu0 0.0
    %1129 = vmatpush2.msra.mxu0 0.0
    %1130 = vmatprep.subr.mxu0 0.0
    %1131 = vmatpush2.msra.mxu0 0.0
    %1132 = vmatprep.subr.mxu0 0.0
    %1133 = vmatpush2.msra.mxu0 0.0
    %1134 = vmatprep.subr.mxu0 0.0
    %1135 = vmatpush2.msra.mxu0 0.0
    %1136 = vmatprep.subr.mxu0 0.0
    %1137 = vmatpush2.msra.mxu0 0.0
    %1138 = vmatprep.mubr.f32.mxu0 0.0
    %1139 = vmatmul.mubr.f32.gmra.mxu0 %v1072
    %v1140 = vpop.f32.mrf.mxu0
    %v1141 = vadd.f32 %v1069, %v1140
    %v1142 = vpop.f32.mrf.mxu0
    %1143 = vdwg.mxu0
    %vm1144 = vcmask 87040
    %v1145 = vsel %vm1144, %v1141, -inf
    %1146 = vmax.xlane.f32.xlu0 %v1145
    %v1147 = vpop.xlane.xlu0 %1146
    %v1148 = vsub.f32 %v1141, %v1147
    %v1149 = vmul.f32 %v1148, 1.442695
    %v1150 = vpow.pop %v1149
    %v1151 = vsel %vm1144, %v1150, 0.0
    %1152 = vadd.xlane.f32.xlu0 %v1151
    %v1153 = vpop.xlane.xlu0 %1152
    %v1154 = vrcp.pop %v1153
    %v1155 = vmul.f32 %v1150, %v1154
    %v1156 = vld [vmem:[#allocation20] sm:$0x3f]
    %v1157 = vmul.f32 %v1155, %v1156
    %v1158 = vsel %vm1144, %v1157, 0.0
    %1159 = vadd.xlane.f32.xlu0 %v1158
    %v1160 = vpop.xlane.xlu0 %1159
    %v1161 = vlog2.pop %v1160
    %v1162 = vmul.f32 %v1161, 0.6931472
    %vm1163 = vcmask 5120
    %v1164 = vsel %vm1163, %v1162, 0.0
    %1165 = vadd.xlane.f32.xlu0 %v1164
    %v1166 = vpop.xlane.xlu0 %1165
    %v1167 = vrot.slane %v1166, 4
    %v1168 = vadd.f32 %v1166, %v1167
    %v1169 = vrot.slane %v1168, 2
    %v1170 = vadd.f32 %v1168, %v1169
    %v1171 = vrot.slane %v1170, 1
    %v1172 = vadd.f32 %v1170, %v1171
    %s1173 = vtos %v1172
    %v1174 = vlaneseq
    %v1175 = vand.u32 %v1174, 127
    %vm1176 = vcmp.eq.s32.totalorder %v1175, 0
    %v1177 = vsel %vm1176, %v1059, 0.0
    %vm1178 = vcmp.eq.s32.totalorder %v1175, 1
    %v1179 = vstv %s1173
    %v1180 = vsel %vm1178, %v1179, 0.0
    %v1181 = vadd.f32 %v1177, %v1180
    %1182 = vst [vmem:[#allocation25] sm:$0x1] %v1181
    // Predicated region
    $region122: #{tpu_custom_call.1} parent=1 // pred_check
      _
    $region123: #{tpu_custom_call.1} parent=1 // pred_check_branch
      %1184 = sbr.rel (0) target = $region125
    $region124: #{tpu_custom_call.1} parent=1 // pred_region
      %s1186 = ssub.s32 128, 128
      %1187 = vsyncadd [#allocation4], %s1186
      %s1189 = sshll.u32 [#allocation22], 4
      %s1190 = int_to_ptr.vmem [resolvable:$true] %s1189
      %1192 = dma.vmem_to_hbm [thread:$0]  %s1190, 128, %s18, [#allocation4]
    $region125: #{tpu_custom_call.1} parent=1 // pred_fallthru
      _
    // Predicated region
    $region126: #{tpu_custom_call.1} parent=1 // pred_check
      _
    $region127: #{tpu_custom_call.1} parent=1 // pred_check_branch
      %1194 = sbr.rel (0) target = $region129
    $region128: #{tpu_custom_call.1} parent=1 // pred_region
      %s1196 = ssub.s32 16, 16
      %1197 = vsyncadd [#allocation24], %s1196
      %s1199 = sshll.u32 [#allocation23], 4
      %s1200 = int_to_ptr.vmem [resolvable:$true] %s1199
      %1202 = dma.vmem_to_hbm [thread:$0]  %s1200, 16, %s19, [#allocation24]
    $region129: #{tpu_custom_call.1} parent=1 // pred_fallthru
      _
    // Predicated region
    $region130: #{tpu_custom_call.1} parent=1 // pred_check
      _
    $region131: #{tpu_custom_call.1} parent=1 // pred_check_branch
      %1204 = sbr.rel (0) target = $region133
    $region132: #{tpu_custom_call.1} parent=1 // pred_region
      %s1206 = ssub.s32 16, 16
      %1207 = vsyncadd [#allocation24], %s1206
      %s1209 = sshll.u32 [#allocation25], 4
      %s1210 = int_to_ptr.vmem [resolvable:$true] %s1209
      %1212 = dma.vmem_to_hbm [thread:$0]  %s1210, 16, %s20, [#allocation24]
    $region133: #{tpu_custom_call.1} parent=1 // pred_fallthru
      _
    // Predicated region
    $region134: #{tpu_custom_call.1} parent=1 // pred_check
      _
    $region135: #{tpu_custom_call.1} parent=1 // pred_check_branch
      %1214 = sbr.rel (0) target = $region137
    $region136: #{tpu_custom_call.1} parent=1 // pred_region
      %1215 = dma.done [#allocation4], 128
    $region137: #{tpu_custom_call.1} parent=1 // pred_fallthru
      _
    // Predicated region
    $region138: #{tpu_custom_call.1} parent=1 // pred_check
      _
    $region139: #{tpu_custom_call.1} parent=1 // pred_check_branch
      %1217 = sbr.rel (0) target = $region141
    $region140: #{tpu_custom_call.1} parent=1 // pred_region
      %1218 = dma.done [#allocation24], 16
    $region141: #{tpu_custom_call.1} parent=1 // pred_fallthru
      _
    // Predicated region
    $region142: #{tpu_custom_call.1} parent=1 // pred_check
      _
    $region143: #{tpu_custom_call.1} parent=1 // pred_check_branch
      %1220 = sbr.rel (0) target = $region145
    $region144: #{tpu_custom_call.1} parent=1 // pred_region
      %1221 = dma.done [#allocation24], 16
    $region145: #{tpu_custom_call.1} parent=1 // pred_fallthru
      _
    %1222 = vsyncpa [#allocation3], 1
    %1223 = vsyncpa [#allocation6], 1
    %1224 = vsyncpa [#allocation9], 1
    %1225 = vsyncpa [#allocation12], 1
    %1226 = vsyncpa [#allocation15], 1
    %1227 = vsyncpa [#allocation18], 1
    %1228 = vsyncpa [#allocation21], 1
    %1229 = vsyncpa [#allocation4], 1
    %1230 = vsyncpa [#allocation24], 1

</llo_original>
